<compile_context>
chip_gen: v7x
topology: tpu7x:2x2x1
jax: 0.10.0
libtpu: 0.0.40
codegen_flags: <defaults>
</compile_context>

<pallas_src>
import functools

import jax
import jax.numpy as jnp
import numpy as np
from jax import lax
from jax.experimental import pallas as pl
from jax.experimental.pallas import tpu as pltpu


# ----------------------------- Haar basis (pure python, unused by 'trans') -----------------------------
def Haar_wavelet_basis(num_col, num_basis):
    interval = max(1, num_col // num_basis)
    idx_basis = [value for idx in range(num_col // (interval * 2))
                 for value in range((idx * 2 + 1) * interval, (idx * 2 + 2) * interval)]
    if num_basis > 1:
        idx_basis.extend(list(range(idx_basis[-1] + interval, num_col)))
    return idx_basis


# ----------------------------- Fused Pallas kernel -----------------------------
def _fused_attention_kernel(x_ref, wq_ref, wk_ref, wv_ref, wo_ref, b_ref,
                            o_ref, a_ref, *, heads, dim_head, scale):
    """One batch element per grid step.

    x_ref : (1, N, D)        input tokens
    wq/wk/wv_ref : (H, D, Dh) per-head projection weights (already transposed)
    wo_ref : (H, Dh, D)      per-head slice of the output projection
    b_ref  : (1, D)          output projection bias
    o_ref  : (1, N, D)       final output (to_out applied)
    a_ref  : (1, H, N, N)    attention probabilities
    """
    x = x_ref[0].astype(jnp.float32)                                   # (N, D)
    n = x_ref.shape[1]
    d = wo_ref.shape[2]

    acc = jnp.zeros((n, d), dtype=jnp.float32)
    for h in range(heads):                     # static unroll; heads is small
        # Per-head QKV projection (plain 2-D MXU matmuls, no bias).
        qh = jnp.dot(x, wq_ref[h].astype(jnp.float32),
                     preferred_element_type=jnp.float32) * scale       # scale folded into q
        kh = jnp.dot(x, wk_ref[h].astype(jnp.float32),
                     preferred_element_type=jnp.float32)
        vh = jnp.dot(x, wv_ref[h].astype(jnp.float32),
                     preferred_element_type=jnp.float32)

        # q @ k^T without an explicit transpose: contract last dims of both.
        dots = lax.dot_general(qh, kh, (((1,), (1,)), ((), ())),
                               preferred_element_type=jnp.float32)     # (N, N)

        # Numerically stable softmax over the last axis.
        dots = dots - jnp.max(dots, axis=-1, keepdims=True)
        e = jnp.exp(dots)
        attn = e * pl.reciprocal(jnp.sum(e, axis=-1, keepdims=True), approx=False)
        a_ref[0, h] = attn.astype(a_ref.dtype)

        # attn @ v, then fold this head's share of the output projection.
        oh = jnp.dot(attn, vh, preferred_element_type=jnp.float32)     # (N, Dh)
        acc = acc + jnp.dot(oh, wo_ref[h].astype(jnp.float32),
                            preferred_element_type=jnp.float32)        # (N, D)

    # to_out bias; Dropout(p=0) is identity.
    o_ref[0] = (acc + b_ref[...].astype(jnp.float32)).astype(o_ref.dtype)


# ----------------------------- Wrapper -----------------------------
def attention_forward(x, params, *, heads, dim_head):
    """Full module forward (attn='trans', dropout=0). Returns (out, attn)."""
    B, N, D = x.shape
    inner_dim = heads * dim_head
    scale = dim_head ** (-0.5)

    # PyTorch Linear weights are (out_features, in_features).
    # Pre-reshape weights once so the kernel needs no activation transposes:
    #   q = x @ w_qkv[0:inner].T  ->  per-head (D, Dh) matrices, stacked (H, D, Dh)
    w_qkv = params["w_qkv"]                                     # (3*inner, D)
    def per_head_proj(w):                                       # w: (inner, D)
        return w.T.reshape(D, heads, dim_head).transpose(1, 0, 2)   # (H, D, Dh)
    wq = per_head_proj(w_qkv[0 * inner_dim:1 * inner_dim])
    wk = per_head_proj(w_qkv[1 * inner_dim:2 * inner_dim])
    wv = per_head_proj(w_qkv[2 * inner_dim:3 * inner_dim])
    # out = concat_h(out_h) @ w_out.T + b  ==  sum_h out_h @ w_out.T[h*Dh:(h+1)*Dh]
    wo = params["w_out"].T.reshape(heads, dim_head, D)          # (H, Dh, D)
    b_out = params["b_out"].reshape(1, D)

    kernel = functools.partial(_fused_attention_kernel,
                               heads=heads, dim_head=dim_head, scale=scale)

    const3 = lambda b: (0, 0, 0)
    out, attn = pl.pallas_call(
        kernel,
        out_shape=(jax.ShapeDtypeStruct((B, N, D), x.dtype),
                   jax.ShapeDtypeStruct((B, heads, N, N), x.dtype)),
        grid=(B,),
        in_specs=[
            pl.BlockSpec((1, N, D), lambda b: (b, 0, 0)),               # x
            pl.BlockSpec((heads, D, dim_head), const3),                 # wq
            pl.BlockSpec((heads, D, dim_head), const3),                 # wk
            pl.BlockSpec((heads, D, dim_head), const3),                 # wv
            pl.BlockSpec((heads, dim_head, D), const3),                 # wo
            pl.BlockSpec((1, D), lambda b: (0, 0)),                     # b_out
        ],
        out_specs=(
            pl.BlockSpec((1, N, D), lambda b: (b, 0, 0)),               # out
            pl.BlockSpec((1, heads, N, N), lambda b: (b, 0, 0, 0)),     # attn
        ),
        compiler_params=pltpu.CompilerParams(
            dimension_semantics=("parallel",)),
    )(x, wq, wk, wv, wo, b_out)
    return out, attn


# ----------------------------- Reference (pure JAX, mirrors PyTorch) -----------------------------
def attention_forward_ref(x, params, *, heads, dim_head):
    B, N, D = x.shape
    inner_dim = heads * dim_head
    scale = dim_head ** (-0.5)
    qkv = x @ params["w_qkv"].T
    q, k, v = jnp.split(qkv, 3, axis=-1)
    to_h = lambda t: t.reshape(B, N, heads, dim_head).transpose(0, 2, 1, 3)
    q, k, v = map(to_h, (q, k, v))
    dots = jnp.einsum("bhnd,bhmd->bhnm", q, k) * scale
    attn = jax.nn.softmax(dots, axis=-1)
    out = jnp.einsum("bhnm,bhmd->bhnd", attn, v)
    out = out.transpose(0, 2, 1, 3).reshape(B, N, inner_dim)
    out = out @ params["w_out"].T + params["b_out"]
    return out, attn


# ----------------------------- Main -----------------------------
if __name__ == "__main__":
    # Small shapes consistent with the module.
    B, N, dim = 2, 8, 32
    heads, dim_head = 4, 16
    layer_idx = 1
    inner_dim = heads * dim_head

    # (computed for parity with __init__; only used by the 'swd' branch)
    col_descend = Haar_wavelet_basis(num_col=dim_head, num_basis=2 ** layer_idx)

    key = jax.random.PRNGKey(0)
    k_x, k_qkv, k_out, k_b = jax.random.split(key, 4)

    x = jax.random.normal(k_x, (B, N, dim), dtype=jnp.float32)
    params = {
        # PyTorch Linear weights are (out_features, in_features).
        "w_qkv": jax.random.normal(k_qkv, (inner_dim * 3, dim), dtype=jnp.float32) * 0.02,
        "w_out": jax.random.normal(k_out, (dim, inner_dim), dtype=jnp.float32) * 0.02,
        "b_out": jax.random.normal(k_b, (dim,), dtype=jnp.float32) * 0.02,
    }

    out, attn = attention_forward(x, params, heads=heads, dim_head=dim_head)
    out = jax.block_until_ready(out)
    attn = jax.block_until_ready(attn)

    out_ref, attn_ref = attention_forward_ref(x, params, heads=heads, dim_head=dim_head)
    np.testing.assert_allclose(np.asarray(out), np.asarray(out_ref), rtol=1e-5, atol=1e-5)
    np.testing.assert_allclose(np.asarray(attn), np.asarray(attn_ref), rtol=1e-5, atol=1e-5)

    print("KERNEL_OK")
</pallas_src>

<mosaic_0001>
module attributes {stable_mosaic.version = 11 : i64} {
  func.func @_fused_attention_kernel(%arg0: i32, %arg1: memref<1x8x32xf32, #tpu.memory_space<vmem>>, %arg2: memref<4x32x16xf32, #tpu.memory_space<vmem>>, %arg3: memref<4x32x16xf32, #tpu.memory_space<vmem>>, %arg4: memref<4x32x16xf32, #tpu.memory_space<vmem>>, %arg5: memref<4x16x32xf32, #tpu.memory_space<vmem>>, %arg6: memref<1x32xf32, #tpu.memory_space<vmem>>, %arg7: memref<1x8x32xf32, #tpu.memory_space<vmem>>, %arg8: memref<1x4x8x8xf32, #tpu.memory_space<vmem>>) attributes {dimension_semantics = [#tpu.dimension_semantics<parallel>], iteration_bounds = array<i64: 2>, scalar_prefetch = 0 : i64, scratch_operands = 0 : i64, tpu.core_type = #tpu.core_type<tc>, window_params = [{transform_indices = @transform_0, window_bounds = array<i64: 1, 8, 32>}, {pipeline_mode = #tpu.pipeline_mode<synchronous>, transform_indices = @transform_1, window_bounds = array<i64: 4, 32, 16>}, {pipeline_mode = #tpu.pipeline_mode<synchronous>, transform_indices = @transform_2, window_bounds = array<i64: 4, 32, 16>}, {pipeline_mode = #tpu.pipeline_mode<synchronous>, transform_indices = @transform_3, window_bounds = array<i64: 4, 32, 16>}, {pipeline_mode = #tpu.pipeline_mode<synchronous>, transform_indices = @transform_4, window_bounds = array<i64: 4, 16, 32>}, {pipeline_mode = #tpu.pipeline_mode<synchronous>, transform_indices = @transform_5, window_bounds = array<i64: 1, 32>}, {transform_indices = @transform_6, window_bounds = array<i64: 1, 8, 32>}, {transform_indices = @transform_7, window_bounds = array<i64: 1, 4, 8, 8>}]} {
    %c0 = arith.constant 0 : index
    %c0_0 = arith.constant 0 : index
    %c0_1 = arith.constant 0 : index
    %0 = vector.load %arg1[%c0, %c0_0, %c0_1] : memref<1x8x32xf32, #tpu.memory_space<vmem>>, vector<1x8x32xf32>
    %1 = vector.shape_cast %0 : vector<1x8x32xf32> to vector<8x32xf32>
    %cst = arith.constant 0.000000e+00 : f32
    %2 = vector.broadcast %cst : f32 to vector<8x32xf32>
    %c0_2 = arith.constant 0 : index
    %c0_3 = arith.constant 0 : index
    %c0_4 = arith.constant 0 : index
    %3 = vector.load %arg2[%c0_2, %c0_3, %c0_4] : memref<4x32x16xf32, #tpu.memory_space<vmem>>, vector<1x32x16xf32>
    %4 = vector.shape_cast %3 : vector<1x32x16xf32> to vector<32x16xf32>
    %cst_5 = arith.constant dense<0.000000e+00> : vector<8x16xf32>
    %5 = tpu.matmul %1, %4, %cst_5 {dimension_numbers = #tpu.dot_dimension_numbers<[1], [0], [0], [1], [0, 0, 1, 1], [], []>} : vector<8x32xf32>, vector<32x16xf32>, vector<8x16xf32> -> vector<8x16xf32>
    %cst_6 = arith.constant 2.500000e-01 : f32
    %6 = vector.broadcast %cst_6 : f32 to vector<8x16xf32>
    %7 = arith.mulf %5, %6 : vector<8x16xf32>
    %c0_7 = arith.constant 0 : index
    %c0_8 = arith.constant 0 : index
    %c0_9 = arith.constant 0 : index
    %8 = vector.load %arg3[%c0_7, %c0_8, %c0_9] : memref<4x32x16xf32, #tpu.memory_space<vmem>>, vector<1x32x16xf32>
    %9 = vector.shape_cast %8 : vector<1x32x16xf32> to vector<32x16xf32>
    %cst_10 = arith.constant dense<0.000000e+00> : vector<8x16xf32>
    %10 = tpu.matmul %1, %9, %cst_10 {dimension_numbers = #tpu.dot_dimension_numbers<[1], [0], [0], [1], [0, 0, 1, 1], [], []>} : vector<8x32xf32>, vector<32x16xf32>, vector<8x16xf32> -> vector<8x16xf32>
    %c0_11 = arith.constant 0 : index
    %c0_12 = arith.constant 0 : index
    %c0_13 = arith.constant 0 : index
    %11 = vector.load %arg4[%c0_11, %c0_12, %c0_13] : memref<4x32x16xf32, #tpu.memory_space<vmem>>, vector<1x32x16xf32>
    %12 = vector.shape_cast %11 : vector<1x32x16xf32> to vector<32x16xf32>
    %cst_14 = arith.constant dense<0.000000e+00> : vector<8x16xf32>
    %13 = tpu.matmul %1, %12, %cst_14 {dimension_numbers = #tpu.dot_dimension_numbers<[1], [0], [0], [1], [0, 0, 1, 1], [], []>} : vector<8x32xf32>, vector<32x16xf32>, vector<8x16xf32> -> vector<8x16xf32>
    %cst_15 = arith.constant dense<0.000000e+00> : vector<8x8xf32>
    %14 = tpu.matmul %7, %10, %cst_15 {dimension_numbers = #tpu.dot_dimension_numbers<[1], [1], [0], [0], [0, 0, 1, 0], [], []>} : vector<8x16xf32>, vector<8x16xf32>, vector<8x8xf32> -> vector<8x8xf32>
    %cst_16 = arith.constant dense<0xFF800000> : vector<8xf32>
    %15 = vector.multi_reduction <maximumf>, %14, %cst_16 [1] : vector<8x8xf32> to vector<8xf32>
    %16 = vector.shape_cast %15 : vector<8xf32> to vector<8x1xf32>
    %17 = vector.broadcast %16 : vector<8x1xf32> to vector<8x8xf32>
    %18 = arith.subf %14, %17 : vector<8x8xf32>
    %19 = math.exp %18 : vector<8x8xf32>
    %cst_17 = arith.constant dense<0.000000e+00> : vector<8xf32>
    %20 = vector.multi_reduction <add>, %19, %cst_17 [1] : vector<8x8xf32> to vector<8xf32>
    %21 = vector.shape_cast %20 : vector<8xf32> to vector<8x1xf32>
    %22 = tpu.reciprocal %21 : vector<8x1xf32> -> vector<8x1xf32>
    %23 = vector.broadcast %22 : vector<8x1xf32> to vector<8x8xf32>
    %24 = arith.mulf %19, %23 : vector<8x8xf32>
    %c0_18 = arith.constant 0 : index
    %c0_19 = arith.constant 0 : index
    %c0_20 = arith.constant 0 : index
    %c0_21 = arith.constant 0 : index
    %25 = vector.load %arg8[%c0_18, %c0_19, %c0_20, %c0_21] : memref<1x4x8x8xf32, #tpu.memory_space<vmem>>, vector<1x1x8x8xf32>
    %26 = vector.shape_cast %25 : vector<1x1x8x8xf32> to vector<8x8xf32>
    %27 = vector.shape_cast %24 : vector<8x8xf32> to vector<1x1x8x8xf32>
    tpu.vector_store %arg8[%c0_18, %c0_19, %c0_20, %c0_21], %27 {strides = array<i32>} : memref<1x4x8x8xf32, #tpu.memory_space<vmem>>, vector<1x1x8x8xf32>,
    %cst_22 = arith.constant dense<0.000000e+00> : vector<8x16xf32>
    %28 = tpu.matmul %24, %13, %cst_22 {dimension_numbers = #tpu.dot_dimension_numbers<[1], [0], [0], [1], [0, 0, 1, 1], [], []>} : vector<8x8xf32>, vector<8x16xf32>, vector<8x16xf32> -> vector<8x16xf32>
    %c0_23 = arith.constant 0 : index
    %c0_24 = arith.constant 0 : index
    %c0_25 = arith.constant 0 : index
    %29 = vector.load %arg5[%c0_23, %c0_24, %c0_25] : memref<4x16x32xf32, #tpu.memory_space<vmem>>, vector<1x16x32xf32>
    %30 = vector.shape_cast %29 : vector<1x16x32xf32> to vector<16x32xf32>
    %cst_26 = arith.constant dense<0.000000e+00> : vector<8x32xf32>
    %31 = tpu.matmul %28, %30, %cst_26 {dimension_numbers = #tpu.dot_dimension_numbers<[1], [0], [0], [1], [0, 0, 1, 1], [], []>} : vector<8x16xf32>, vector<16x32xf32>, vector<8x32xf32> -> vector<8x32xf32>
    %32 = arith.addf %2, %31 : vector<8x32xf32>
    %c1 = arith.constant 1 : index
    %c0_27 = arith.constant 0 : index
    %c0_28 = arith.constant 0 : index
    %33 = vector.load %arg2[%c1, %c0_27, %c0_28] : memref<4x32x16xf32, #tpu.memory_space<vmem>>, vector<1x32x16xf32>
    %34 = vector.shape_cast %33 : vector<1x32x16xf32> to vector<32x16xf32>
    %cst_29 = arith.constant dense<0.000000e+00> : vector<8x16xf32>
    %35 = tpu.matmul %1, %34, %cst_29 {dimension_numbers = #tpu.dot_dimension_numbers<[1], [0], [0], [1], [0, 0, 1, 1], [], []>} : vector<8x32xf32>, vector<32x16xf32>, vector<8x16xf32> -> vector<8x16xf32>
    %cst_30 = arith.constant 2.500000e-01 : f32
    %36 = vector.broadcast %cst_30 : f32 to vector<8x16xf32>
    %37 = arith.mulf %35, %36 : vector<8x16xf32>
    %c1_31 = arith.constant 1 : index
    %c0_32 = arith.constant 0 : index
    %c0_33 = arith.constant 0 : index
    %38 = vector.load %arg3[%c1_31, %c0_32, %c0_33] : memref<4x32x16xf32, #tpu.memory_space<vmem>>, vector<1x32x16xf32>
    %39 = vector.shape_cast %38 : vector<1x32x16xf32> to vector<32x16xf32>
    %cst_34 = arith.constant dense<0.000000e+00> : vector<8x16xf32>
    %40 = tpu.matmul %1, %39, %cst_34 {dimension_numbers = #tpu.dot_dimension_numbers<[1], [0], [0], [1], [0, 0, 1, 1], [], []>} : vector<8x32xf32>, vector<32x16xf32>, vector<8x16xf32> -> vector<8x16xf32>
    %c1_35 = arith.constant 1 : index
    %c0_36 = arith.constant 0 : index
    %c0_37 = arith.constant 0 : index
    %41 = vector.load %arg4[%c1_35, %c0_36, %c0_37] : memref<4x32x16xf32, #tpu.memory_space<vmem>>, vector<1x32x16xf32>
    %42 = vector.shape_cast %41 : vector<1x32x16xf32> to vector<32x16xf32>
    %cst_38 = arith.constant dense<0.000000e+00> : vector<8x16xf32>
    %43 = tpu.matmul %1, %42, %cst_38 {dimension_numbers = #tpu.dot_dimension_numbers<[1], [0], [0], [1], [0, 0, 1, 1], [], []>} : vector<8x32xf32>, vector<32x16xf32>, vector<8x16xf32> -> vector<8x16xf32>
    %cst_39 = arith.constant dense<0.000000e+00> : vector<8x8xf32>
    %44 = tpu.matmul %37, %40, %cst_39 {dimension_numbers = #tpu.dot_dimension_numbers<[1], [1], [0], [0], [0, 0, 1, 0], [], []>} : vector<8x16xf32>, vector<8x16xf32>, vector<8x8xf32> -> vector<8x8xf32>
    %cst_40 = arith.constant dense<0xFF800000> : vector<8xf32>
    %45 = vector.multi_reduction <maximumf>, %44, %cst_40 [1] : vector<8x8xf32> to vector<8xf32>
    %46 = vector.shape_cast %45 : vector<8xf32> to vector<8x1xf32>
    %47 = vector.broadcast %46 : vector<8x1xf32> to vector<8x8xf32>
    %48 = arith.subf %44, %47 : vector<8x8xf32>
    %49 = math.exp %48 : vector<8x8xf32>
    %cst_41 = arith.constant dense<0.000000e+00> : vector<8xf32>
    %50 = vector.multi_reduction <add>, %49, %cst_41 [1] : vector<8x8xf32> to vector<8xf32>
    %51 = vector.shape_cast %50 : vector<8xf32> to vector<8x1xf32>
    %52 = tpu.reciprocal %51 : vector<8x1xf32> -> vector<8x1xf32>
    %53 = vector.broadcast %52 : vector<8x1xf32> to vector<8x8xf32>
    %54 = arith.mulf %49, %53 : vector<8x8xf32>
    %c0_42 = arith.constant 0 : index
    %c1_43 = arith.constant 1 : index
    %c0_44 = arith.constant 0 : index
    %c0_45 = arith.constant 0 : index
    %55 = vector.load %arg8[%c0_42, %c1_43, %c0_44, %c0_45] : memref<1x4x8x8xf32, #tpu.memory_space<vmem>>, vector<1x1x8x8xf32>
    %56 = vector.shape_cast %55 : vector<1x1x8x8xf32> to vector<8x8xf32>
    %57 = vector.shape_cast %54 : vector<8x8xf32> to vector<1x1x8x8xf32>
    tpu.vector_store %arg8[%c0_42, %c1_43, %c0_44, %c0_45], %57 {strides = array<i32>} : memref<1x4x8x8xf32, #tpu.memory_space<vmem>>, vector<1x1x8x8xf32>,
    %cst_46 = arith.constant dense<0.000000e+00> : vector<8x16xf32>
    %58 = tpu.matmul %54, %43, %cst_46 {dimension_numbers = #tpu.dot_dimension_numbers<[1], [0], [0], [1], [0, 0, 1, 1], [], []>} : vector<8x8xf32>, vector<8x16xf32>, vector<8x16xf32> -> vector<8x16xf32>
    %c1_47 = arith.constant 1 : index
    %c0_48 = arith.constant 0 : index
    %c0_49 = arith.constant 0 : index
    %59 = vector.load %arg5[%c1_47, %c0_48, %c0_49] : memref<4x16x32xf32, #tpu.memory_space<vmem>>, vector<1x16x32xf32>
    %60 = vector.shape_cast %59 : vector<1x16x32xf32> to vector<16x32xf32>
    %cst_50 = arith.constant dense<0.000000e+00> : vector<8x32xf32>
    %61 = tpu.matmul %58, %60, %cst_50 {dimension_numbers = #tpu.dot_dimension_numbers<[1], [0], [0], [1], [0, 0, 1, 1], [], []>} : vector<8x16xf32>, vector<16x32xf32>, vector<8x32xf32> -> vector<8x32xf32>
    %62 = arith.addf %32, %61 : vector<8x32xf32>
    %c2 = arith.constant 2 : index
    %c0_51 = arith.constant 0 : index
    %c0_52 = arith.constant 0 : index
    %63 = vector.load %arg2[%c2, %c0_51, %c0_52] : memref<4x32x16xf32, #tpu.memory_space<vmem>>, vector<1x32x16xf32>
    %64 = vector.shape_cast %63 : vector<1x32x16xf32> to vector<32x16xf32>
    %cst_53 = arith.constant dense<0.000000e+00> : vector<8x16xf32>
    %65 = tpu.matmul %1, %64, %cst_53 {dimension_numbers = #tpu.dot_dimension_numbers<[1], [0], [0], [1], [0, 0, 1, 1], [], []>} : vector<8x32xf32>, vector<32x16xf32>, vector<8x16xf32> -> vector<8x16xf32>
    %cst_54 = arith.constant 2.500000e-01 : f32
    %66 = vector.broadcast %cst_54 : f32 to vector<8x16xf32>
    %67 = arith.mulf %65, %66 : vector<8x16xf32>
    %c2_55 = arith.constant 2 : index
    %c0_56 = arith.constant 0 : index
    %c0_57 = arith.constant 0 : index
    %68 = vector.load %arg3[%c2_55, %c0_56, %c0_57] : memref<4x32x16xf32, #tpu.memory_space<vmem>>, vector<1x32x16xf32>
    %69 = vector.shape_cast %68 : vector<1x32x16xf32> to vector<32x16xf32>
    %cst_58 = arith.constant dense<0.000000e+00> : vector<8x16xf32>
    %70 = tpu.matmul %1, %69, %cst_58 {dimension_numbers = #tpu.dot_dimension_numbers<[1], [0], [0], [1], [0, 0, 1, 1], [], []>} : vector<8x32xf32>, vector<32x16xf32>, vector<8x16xf32> -> vector<8x16xf32>
    %c2_59 = arith.constant 2 : index
    %c0_60 = arith.constant 0 : index
    %c0_61 = arith.constant 0 : index
    %71 = vector.load %arg4[%c2_59, %c0_60, %c0_61] : memref<4x32x16xf32, #tpu.memory_space<vmem>>, vector<1x32x16xf32>
    %72 = vector.shape_cast %71 : vector<1x32x16xf32> to vector<32x16xf32>
    %cst_62 = arith.constant dense<0.000000e+00> : vector<8x16xf32>
    %73 = tpu.matmul %1, %72, %cst_62 {dimension_numbers = #tpu.dot_dimension_numbers<[1], [0], [0], [1], [0, 0, 1, 1], [], []>} : vector<8x32xf32>, vector<32x16xf32>, vector<8x16xf32> -> vector<8x16xf32>
    %cst_63 = arith.constant dense<0.000000e+00> : vector<8x8xf32>
    %74 = tpu.matmul %67, %70, %cst_63 {dimension_numbers = #tpu.dot_dimension_numbers<[1], [1], [0], [0], [0, 0, 1, 0], [], []>} : vector<8x16xf32>, vector<8x16xf32>, vector<8x8xf32> -> vector<8x8xf32>
    %cst_64 = arith.constant dense<0xFF800000> : vector<8xf32>
    %75 = vector.multi_reduction <maximumf>, %74, %cst_64 [1] : vector<8x8xf32> to vector<8xf32>
    %76 = vector.shape_cast %75 : vector<8xf32> to vector<8x1xf32>
    %77 = vector.broadcast %76 : vector<8x1xf32> to vector<8x8xf32>
    %78 = arith.subf %74, %77 : vector<8x8xf32>
    %79 = math.exp %78 : vector<8x8xf32>
    %cst_65 = arith.constant dense<0.000000e+00> : vector<8xf32>
    %80 = vector.multi_reduction <add>, %79, %cst_65 [1] : vector<8x8xf32> to vector<8xf32>
    %81 = vector.shape_cast %80 : vector<8xf32> to vector<8x1xf32>
    %82 = tpu.reciprocal %81 : vector<8x1xf32> -> vector<8x1xf32>
    %83 = vector.broadcast %82 : vector<8x1xf32> to vector<8x8xf32>
    %84 = arith.mulf %79, %83 : vector<8x8xf32>
    %c0_66 = arith.constant 0 : index
    %c2_67 = arith.constant 2 : index
    %c0_68 = arith.constant 0 : index
    %c0_69 = arith.constant 0 : index
    %85 = vector.load %arg8[%c0_66, %c2_67, %c0_68, %c0_69] : memref<1x4x8x8xf32, #tpu.memory_space<vmem>>, vector<1x1x8x8xf32>
    %86 = vector.shape_cast %85 : vector<1x1x8x8xf32> to vector<8x8xf32>
    %87 = vector.shape_cast %84 : vector<8x8xf32> to vector<1x1x8x8xf32>
    tpu.vector_store %arg8[%c0_66, %c2_67, %c0_68, %c0_69], %87 {strides = array<i32>} : memref<1x4x8x8xf32, #tpu.memory_space<vmem>>, vector<1x1x8x8xf32>,
    %cst_70 = arith.constant dense<0.000000e+00> : vector<8x16xf32>
    %88 = tpu.matmul %84, %73, %cst_70 {dimension_numbers = #tpu.dot_dimension_numbers<[1], [0], [0], [1], [0, 0, 1, 1], [], []>} : vector<8x8xf32>, vector<8x16xf32>, vector<8x16xf32> -> vector<8x16xf32>
    %c2_71 = arith.constant 2 : index
    %c0_72 = arith.constant 0 : index
    %c0_73 = arith.constant 0 : index
    %89 = vector.load %arg5[%c2_71, %c0_72, %c0_73] : memref<4x16x32xf32, #tpu.memory_space<vmem>>, vector<1x16x32xf32>
    %90 = vector.shape_cast %89 : vector<1x16x32xf32> to vector<16x32xf32>
    %cst_74 = arith.constant dense<0.000000e+00> : vector<8x32xf32>
    %91 = tpu.matmul %88, %90, %cst_74 {dimension_numbers = #tpu.dot_dimension_numbers<[1], [0], [0], [1], [0, 0, 1, 1], [], []>} : vector<8x16xf32>, vector<16x32xf32>, vector<8x32xf32> -> vector<8x32xf32>
    %92 = arith.addf %62, %91 : vector<8x32xf32>
    %c3 = arith.constant 3 : index
    %c0_75 = arith.constant 0 : index
    %c0_76 = arith.constant 0 : index
    %93 = vector.load %arg2[%c3, %c0_75, %c0_76] : memref<4x32x16xf32, #tpu.memory_space<vmem>>, vector<1x32x16xf32>
    %94 = vector.shape_cast %93 : vector<1x32x16xf32> to vector<32x16xf32>
    %cst_77 = arith.constant dense<0.000000e+00> : vector<8x16xf32>
    %95 = tpu.matmul %1, %94, %cst_77 {dimension_numbers = #tpu.dot_dimension_numbers<[1], [0], [0], [1], [0, 0, 1, 1], [], []>} : vector<8x32xf32>, vector<32x16xf32>, vector<8x16xf32> -> vector<8x16xf32>
    %cst_78 = arith.constant 2.500000e-01 : f32
    %96 = vector.broadcast %cst_78 : f32 to vector<8x16xf32>
    %97 = arith.mulf %95, %96 : vector<8x16xf32>
    %c3_79 = arith.constant 3 : index
    %c0_80 = arith.constant 0 : index
    %c0_81 = arith.constant 0 : index
    %98 = vector.load %arg3[%c3_79, %c0_80, %c0_81] : memref<4x32x16xf32, #tpu.memory_space<vmem>>, vector<1x32x16xf32>
    %99 = vector.shape_cast %98 : vector<1x32x16xf32> to vector<32x16xf32>
    %cst_82 = arith.constant dense<0.000000e+00> : vector<8x16xf32>
    %100 = tpu.matmul %1, %99, %cst_82 {dimension_numbers = #tpu.dot_dimension_numbers<[1], [0], [0], [1], [0, 0, 1, 1], [], []>} : vector<8x32xf32>, vector<32x16xf32>, vector<8x16xf32> -> vector<8x16xf32>
    %c3_83 = arith.constant 3 : index
    %c0_84 = arith.constant 0 : index
    %c0_85 = arith.constant 0 : index
    %101 = vector.load %arg4[%c3_83, %c0_84, %c0_85] : memref<4x32x16xf32, #tpu.memory_space<vmem>>, vector<1x32x16xf32>
    %102 = vector.shape_cast %101 : vector<1x32x16xf32> to vector<32x16xf32>
    %cst_86 = arith.constant dense<0.000000e+00> : vector<8x16xf32>
    %103 = tpu.matmul %1, %102, %cst_86 {dimension_numbers = #tpu.dot_dimension_numbers<[1], [0], [0], [1], [0, 0, 1, 1], [], []>} : vector<8x32xf32>, vector<32x16xf32>, vector<8x16xf32> -> vector<8x16xf32>
    %cst_87 = arith.constant dense<0.000000e+00> : vector<8x8xf32>
    %104 = tpu.matmul %97, %100, %cst_87 {dimension_numbers = #tpu.dot_dimension_numbers<[1], [1], [0], [0], [0, 0, 1, 0], [], []>} : vector<8x16xf32>, vector<8x16xf32>, vector<8x8xf32> -> vector<8x8xf32>
    %cst_88 = arith.constant dense<0xFF800000> : vector<8xf32>
    %105 = vector.multi_reduction <maximumf>, %104, %cst_88 [1] : vector<8x8xf32> to vector<8xf32>
    %106 = vector.shape_cast %105 : vector<8xf32> to vector<8x1xf32>
    %107 = vector.broadcast %106 : vector<8x1xf32> to vector<8x8xf32>
    %108 = arith.subf %104, %107 : vector<8x8xf32>
    %109 = math.exp %108 : vector<8x8xf32>
    %cst_89 = arith.constant dense<0.000000e+00> : vector<8xf32>
    %110 = vector.multi_reduction <add>, %109, %cst_89 [1] : vector<8x8xf32> to vector<8xf32>
    %111 = vector.shape_cast %110 : vector<8xf32> to vector<8x1xf32>
    %112 = tpu.reciprocal %111 : vector<8x1xf32> -> vector<8x1xf32>
    %113 = vector.broadcast %112 : vector<8x1xf32> to vector<8x8xf32>
    %114 = arith.mulf %109, %113 : vector<8x8xf32>
    %c0_90 = arith.constant 0 : index
    %c3_91 = arith.constant 3 : index
    %c0_92 = arith.constant 0 : index
    %c0_93 = arith.constant 0 : index
    %115 = vector.load %arg8[%c0_90, %c3_91, %c0_92, %c0_93] : memref<1x4x8x8xf32, #tpu.memory_space<vmem>>, vector<1x1x8x8xf32>
    %116 = vector.shape_cast %115 : vector<1x1x8x8xf32> to vector<8x8xf32>
    %117 = vector.shape_cast %114 : vector<8x8xf32> to vector<1x1x8x8xf32>
    tpu.vector_store %arg8[%c0_90, %c3_91, %c0_92, %c0_93], %117 {strides = array<i32>} : memref<1x4x8x8xf32, #tpu.memory_space<vmem>>, vector<1x1x8x8xf32>,
    %cst_94 = arith.constant dense<0.000000e+00> : vector<8x16xf32>
    %118 = tpu.matmul %114, %103, %cst_94 {dimension_numbers = #tpu.dot_dimension_numbers<[1], [0], [0], [1], [0, 0, 1, 1], [], []>} : vector<8x8xf32>, vector<8x16xf32>, vector<8x16xf32> -> vector<8x16xf32>
    %c3_95 = arith.constant 3 : index
    %c0_96 = arith.constant 0 : index
    %c0_97 = arith.constant 0 : index
    %119 = vector.load %arg5[%c3_95, %c0_96, %c0_97] : memref<4x16x32xf32, #tpu.memory_space<vmem>>, vector<1x16x32xf32>
    %120 = vector.shape_cast %119 : vector<1x16x32xf32> to vector<16x32xf32>
    %cst_98 = arith.constant dense<0.000000e+00> : vector<8x32xf32>
    %121 = tpu.matmul %118, %120, %cst_98 {dimension_numbers = #tpu.dot_dimension_numbers<[1], [0], [0], [1], [0, 0, 1, 1], [], []>} : vector<8x16xf32>, vector<16x32xf32>, vector<8x32xf32> -> vector<8x32xf32>
    %122 = arith.addf %92, %121 : vector<8x32xf32>
    %c0_99 = arith.constant 0 : index
    %c0_100 = arith.constant 0 : index
    %123 = vector.load %arg6[%c0_99, %c0_100] : memref<1x32xf32, #tpu.memory_space<vmem>>, vector<1x32xf32>
    %124 = vector.broadcast %123 : vector<1x32xf32> to vector<8x32xf32>
    %125 = arith.addf %122, %124 : vector<8x32xf32>
    %c0_101 = arith.constant 0 : index
    %c0_102 = arith.constant 0 : index
    %c0_103 = arith.constant 0 : index
    %126 = vector.load %arg7[%c0_101, %c0_102, %c0_103] : memref<1x8x32xf32, #tpu.memory_space<vmem>>, vector<1x8x32xf32>
    %127 = vector.shape_cast %126 : vector<1x8x32xf32> to vector<8x32xf32>
    %128 = vector.shape_cast %125 : vector<8x32xf32> to vector<1x8x32xf32>
    tpu.vector_store %arg7[%c0_101, %c0_102, %c0_103], %128 {strides = array<i32>} : memref<1x8x32xf32, #tpu.memory_space<vmem>>, vector<1x8x32xf32>,
    return
  }
  func.func @transform_0(%arg0: i32) -> (i32, i32, i32) {
    %c0_i32 = arith.constant 0 : i32
    %c0_i32_0 = arith.constant 0 : i32
    %c0_i32_1 = arith.constant 0 : i32
    return %arg0, %c0_i32, %c0_i32_0 : i32, i32, i32
  }
  func.func @transform_1(%arg0: i32) -> (i32, i32, i32) {
    %c0_i32 = arith.constant 0 : i32
    %c0_i32_0 = arith.constant 0 : i32
    %c0_i32_1 = arith.constant 0 : i32
    %c0_i32_2 = arith.constant 0 : i32
    return %c0_i32, %c0_i32_0, %c0_i32_1 : i32, i32, i32
  }
  func.func @transform_2(%arg0: i32) -> (i32, i32, i32) {
    %c0_i32 = arith.constant 0 : i32
    %c0_i32_0 = arith.constant 0 : i32
    %c0_i32_1 = arith.constant 0 : i32
    %c0_i32_2 = arith.constant 0 : i32
    return %c0_i32, %c0_i32_0, %c0_i32_1 : i32, i32, i32
  }
  func.func @transform_3(%arg0: i32) -> (i32, i32, i32) {
    %c0_i32 = arith.constant 0 : i32
    %c0_i32_0 = arith.constant 0 : i32
    %c0_i32_1 = arith.constant 0 : i32
    %c0_i32_2 = arith.constant 0 : i32
    return %c0_i32, %c0_i32_0, %c0_i32_1 : i32, i32, i32
  }
  func.func @transform_4(%arg0: i32) -> (i32, i32, i32) {
    %c0_i32 = arith.constant 0 : i32
    %c0_i32_0 = arith.constant 0 : i32
    %c0_i32_1 = arith.constant 0 : i32
    %c0_i32_2 = arith.constant 0 : i32
    return %c0_i32, %c0_i32_0, %c0_i32_1 : i32, i32, i32
  }
  func.func @transform_5(%arg0: i32) -> (i32, i32) {
    %c0_i32 = arith.constant 0 : i32
    %c0_i32_0 = arith.constant 0 : i32
    %c0_i32_1 = arith.constant 0 : i32
    return %c0_i32, %c0_i32_0 : i32, i32
  }
  func.func @transform_6(%arg0: i32) -> (i32, i32, i32) {
    %c0_i32 = arith.constant 0 : i32
    %c0_i32_0 = arith.constant 0 : i32
    %c0_i32_1 = arith.constant 0 : i32
    return %arg0, %c0_i32, %c0_i32_0 : i32, i32, i32
  }
  func.func @transform_7(%arg0: i32) -> (i32, i32, i32, i32) {
    %c0_i32 = arith.constant 0 : i32
    %c0_i32_0 = arith.constant 0 : i32
    %c0_i32_1 = arith.constant 0 : i32
    %c0_i32_2 = arith.constant 0 : i32
    return %arg0, %c0_i32, %c0_i32_0, %c0_i32_1 : i32, i32, i32, i32
  }
}

</mosaic_0001>

<llo_original>
// kernel: tpu_custom_call.1
$region0: #{tpu_custom_call.1}
  #allocation0 [shape = 'u32[]', space=smem, size = 0x4, offset = 0x4, fixed_abs, tag = 'smem constant byte address 0x4 - core index']
  #allocation1 [shape = 'u32[144,128]{1,0:T(1,128)}', space=vmem, size = 0x12000, scoped, tag = 'internal scratch']
  %s0 = inlined_call_operand.vmem [shape: f32[2,8,32], index: 0, kind: input, shape index: {}]
  %s1 = inlined_call_operand.vmem [shape: f32[4,32,16], index: 1, kind: input, shape index: {}]
  %s2 = inlined_call_operand.vmem [shape: f32[4,32,16], index: 2, kind: input, shape index: {}]
  %s3 = inlined_call_operand.vmem [shape: f32[4,32,16], index: 3, kind: input, shape index: {}]
  %s4 = inlined_call_operand.vmem [shape: f32[4,16,32], index: 4, kind: input, shape index: {}]
  %s5 = inlined_call_operand.vmem [shape: f32[1,32], index: 5, kind: input, shape index: {}]
  %s6 = inlined_call_operand.hbm [shape: f32[2,8,32], index: 6, kind: output, shape index: {0}]
  %s7 = inlined_call_operand.hbm [shape: f32[2,4,8,8], index: 7, kind: output, shape index: {1}]
  %8 = xla_tuple %s6, %s7
  %s9 = sld [smem:[#allocation0]]
  $region65: #{tpu_custom_call.1} parent=0
    _
  %s11 = ssub.s32 1, %s9
  %s12 = scalar_select 0, %s11, %s9
  $region1: #{tpu_custom_call.1} parent=0
    #allocation2 [shape = 'u8[8192]{0}', space=vmem, size = 0x2000, scoped, tag = 'output window, operand 0']
    #allocation3 [shape = 's32[2]{0}', space=sflag, size = 0x8, scoped, tag = 'scoped memory for tpu_custom_call.1']
    #allocation4 [shape = 'u8[32768]{0}', space=vmem, size = 0x8000, scoped, tag = 'output window, operand 1']
    #allocation5 [shape = 's32[2]{0}', space=sflag, size = 0x8, scoped, tag = 'scoped memory for tpu_custom_call.1']
    %13 = vsyncpa [#allocation3], 0
    %s14 = scalar_lea.sflag [#allocation3], 1
    %15 = vsyncpa %s14, 0
    %16 = vsyncpa [#allocation5], 0
    %s17 = scalar_lea.sflag [#allocation5], 1
    %18 = vsyncpa %s17, 0
    loop: start=0, step=1, limit=4
    $region2: #{tpu_custom_call.1} parent=1 // loop_pre_header
      _
    $region3: #{tpu_custom_call.1} parent=1 // loop_header
      %s20 = sphi 0, %s24
      %p21 = scmp.ge.s32.totalorder %s20, 4
      %s30 = sphi 0, %s32
      %s33 = sphi 0, %s30
      %s34 = sphi 0, %s33
      %s50 = sphi 0, %s34
      %s54 = sphi 0, %s54
      %s56 = sphi 0, %s54
      %s57 = sphi 0, %s56
      %s71 = sphi 0, %s57
      %s75 = sphi 0, %s75
      %s77 = sphi 0, %s75
      %s78 = sphi 0, %s77
      %s92 = sphi 0, %s78
      %s96 = sphi 0, %s96
      %s98 = sphi 0, %s96
      %s99 = sphi 0, %s98
      %s113 = sphi 0, %s99
      %s117 = sphi 0, %s117
      %s119 = sphi 0, %s117
      %s120 = sphi 0, %s119
      %s134 = sphi 0, %s120
      %s138 = sphi 0, %s138
      %s140 = sphi 0, %s138
      %s141 = sphi 0, %s140
      %s155 = sphi 0, %s141
      %s161 = sphi 0, %s163
      %s164 = sphi 0, %s161
      %s165 = sphi 0, %s164
      %s181 = sphi 0, %s165
      %s187 = sphi 0, %s189
      %s190 = sphi 0, %s187
      %s191 = sphi 0, %s190
      %s207 = sphi 0, %s191
    $region4: #{tpu_custom_call.1} parent=1 // loop_header_branch
      %23 = sbr.rel (%p21) target = $region8
    $region5: #{tpu_custom_call.1} parent=1 // loop_body
      %s25 = ssub.s32 %s20, 1
      %s26 = ssub.s32 %s20, 2
      %s27 = sadd.s32 %s20, 1
      %s28 = ssub.s32 %s20, %s27
      %p29 = scmp.eq.s32.totalorder %s28, 0
      %s31 = sadd.s32 %s30, 1
      %s32 = scalar_select %p29, %s30, %s31
      %p35 = pneg %p29
      %p36 = scmp.eq.s32.totalorder %s20, 1
      %p37 = por %p35, %p36
      %p38 = scmp.ne.s32.totalorder %s30, %s33
      %p39 = scmp.eq.s32.totalorder %s20, 0
      %p40 = por %p38, %p39
      %p41 = scmp.ne.s32.totalorder %s30, %s33
      %p42 = scmp.eq.s32.totalorder %s25, 1
      %p43 = por %p41, %p42
      %p44 = scmp.ne.s32.totalorder %s33, %s34
      %p45 = scmp.eq.s32.totalorder %s25, 0
      %p46 = por %p44, %p45
      %p47 = scmp.ne.s32.totalorder %s33, %s34
      %p48 = scmp.eq.s32.totalorder %s26, 1
      %p49 = por %p47, %p48
      %p51 = scmp.ne.s32.totalorder %s34, %s50
      %p52 = scmp.eq.s32.totalorder %s26, 0
      %p53 = por %p51, %p52
      %s55 = sadd.s32 %s54, 1
      %p58 = scmp.eq.s32.totalorder %s20, 1
      %p59 = scmp.ne.s32.totalorder %s54, %s56
      %p60 = scmp.eq.s32.totalorder %s20, 0
      %p61 = por %p59, %p60
      %p62 = scmp.ne.s32.totalorder %s54, %s56
      %p63 = scmp.eq.s32.totalorder %s25, 1
      %p64 = por %p62, %p63
      %p65 = scmp.ne.s32.totalorder %s56, %s57
      %p66 = scmp.eq.s32.totalorder %s25, 0
      %p67 = por %p65, %p66
      %p68 = scmp.ne.s32.totalorder %s56, %s57
      %p69 = scmp.eq.s32.totalorder %s26, 1
      %p70 = por %p68, %p69
      %p72 = scmp.ne.s32.totalorder %s57, %s71
      %p73 = scmp.eq.s32.totalorder %s26, 0
      %p74 = por %p72, %p73
      %s76 = sadd.s32 %s75, 1
      %p79 = scmp.eq.s32.totalorder %s20, 1
      %p80 = scmp.ne.s32.totalorder %s75, %s77
      %p81 = scmp.eq.s32.totalorder %s20, 0
      %p82 = por %p80, %p81
      %p83 = scmp.ne.s32.totalorder %s75, %s77
      %p84 = scmp.eq.s32.totalorder %s25, 1
      %p85 = por %p83, %p84
      %p86 = scmp.ne.s32.totalorder %s77, %s78
      %p87 = scmp.eq.s32.totalorder %s25, 0
      %p88 = por %p86, %p87
      %p89 = scmp.ne.s32.totalorder %s77, %s78
      %p90 = scmp.eq.s32.totalorder %s26, 1
      %p91 = por %p89, %p90
      %p93 = scmp.ne.s32.totalorder %s78, %s92
      %p94 = scmp.eq.s32.totalorder %s26, 0
      %p95 = por %p93, %p94
      %s97 = sadd.s32 %s96, 1
      %p100 = scmp.eq.s32.totalorder %s20, 1
      %p101 = scmp.ne.s32.totalorder %s96, %s98
      %p102 = scmp.eq.s32.totalorder %s20, 0
      %p103 = por %p101, %p102
      %p104 = scmp.ne.s32.totalorder %s96, %s98
      %p105 = scmp.eq.s32.totalorder %s25, 1
      %p106 = por %p104, %p105
      %p107 = scmp.ne.s32.totalorder %s98, %s99
      %p108 = scmp.eq.s32.totalorder %s25, 0
      %p109 = por %p107, %p108
      %p110 = scmp.ne.s32.totalorder %s98, %s99
      %p111 = scmp.eq.s32.totalorder %s26, 1
      %p112 = por %p110, %p111
      %p114 = scmp.ne.s32.totalorder %s99, %s113
      %p115 = scmp.eq.s32.totalorder %s26, 0
      %p116 = por %p114, %p115
      %s118 = sadd.s32 %s117, 1
      %p121 = scmp.eq.s32.totalorder %s20, 1
      %p122 = scmp.ne.s32.totalorder %s117, %s119
      %p123 = scmp.eq.s32.totalorder %s20, 0
      %p124 = por %p122, %p123
      %p125 = scmp.ne.s32.totalorder %s117, %s119
      %p126 = scmp.eq.s32.totalorder %s25, 1
      %p127 = por %p125, %p126
      %p128 = scmp.ne.s32.totalorder %s119, %s120
      %p129 = scmp.eq.s32.totalorder %s25, 0
      %p130 = por %p128, %p129
      %p131 = scmp.ne.s32.totalorder %s119, %s120
      %p132 = scmp.eq.s32.totalorder %s26, 1
      %p133 = por %p131, %p132
      %p135 = scmp.ne.s32.totalorder %s120, %s134
      %p136 = scmp.eq.s32.totalorder %s26, 0
      %p137 = por %p135, %p136
      %s139 = sadd.s32 %s138, 1
      %p142 = scmp.eq.s32.totalorder %s20, 1
      %p143 = scmp.ne.s32.totalorder %s138, %s140
      %p144 = scmp.eq.s32.totalorder %s20, 0
      %p145 = por %p143, %p144
      %p146 = scmp.ne.s32.totalorder %s138, %s140
      %p147 = scmp.eq.s32.totalorder %s25, 1
      %p148 = por %p146, %p147
      %p149 = scmp.ne.s32.totalorder %s140, %s141
      %p150 = scmp.eq.s32.totalorder %s25, 0
      %p151 = por %p149, %p150
      %p152 = scmp.ne.s32.totalorder %s140, %s141
      %p153 = scmp.eq.s32.totalorder %s26, 1
      %p154 = por %p152, %p153
      %p156 = scmp.ne.s32.totalorder %s141, %s155
      %p157 = scmp.eq.s32.totalorder %s26, 0
      %p158 = por %p156, %p157
      %s159 = ssub.s32 %s20, %s27
      %p160 = scmp.eq.s32.totalorder %s159, 0
      %s162 = sadd.s32 %s161, 1
      %s163 = scalar_select %p160, %s161, %s162
      %p166 = pneg %p160
      %p167 = scmp.eq.s32.totalorder %s20, 1
      %p168 = por %p166, %p167
      %p169 = scmp.ne.s32.totalorder %s161, %s164
      %p170 = scmp.eq.s32.totalorder %s20, 0
      %p171 = por %p169, %p170
      %p172 = scmp.ne.s32.totalorder %s161, %s164
      %p173 = scmp.eq.s32.totalorder %s25, 1
      %p174 = por %p172, %p173
      %p175 = scmp.ne.s32.totalorder %s164, %s165
      %p176 = scmp.eq.s32.totalorder %s25, 0
      %p177 = por %p175, %p176
      %p178 = scmp.ne.s32.totalorder %s164, %s165
      %p179 = scmp.eq.s32.totalorder %s26, 1
      %p180 = por %p178, %p179
      %p182 = scmp.ne.s32.totalorder %s165, %s181
      %p183 = scmp.eq.s32.totalorder %s26, 0
      %p184 = por %p182, %p183
      %s185 = ssub.s32 %s20, %s27
      %p186 = scmp.eq.s32.totalorder %s185, 0
      %s188 = sadd.s32 %s187, 1
      %s189 = scalar_select %p186, %s187, %s188
      %p192 = pneg %p186
      %p193 = scmp.eq.s32.totalorder %s20, 1
      %p194 = por %p192, %p193
      %p195 = scmp.ne.s32.totalorder %s187, %s190
      %p196 = scmp.eq.s32.totalorder %s20, 0
      %p197 = por %p195, %p196
      %p198 = scmp.ne.s32.totalorder %s187, %s190
      %p199 = scmp.eq.s32.totalorder %s25, 1
      %p200 = por %p198, %p199
      %p201 = scmp.ne.s32.totalorder %s190, %s191
      %p202 = scmp.eq.s32.totalorder %s25, 0
      %p203 = por %p201, %p202
      %p204 = scmp.ne.s32.totalorder %s190, %s191
      %p205 = scmp.eq.s32.totalorder %s26, 1
      %p206 = por %p204, %p205
      %p208 = scmp.ne.s32.totalorder %s191, %s207
      %p209 = scmp.eq.s32.totalorder %s26, 0
      %p210 = por %p208, %p209
      %p211 = scmp.le.s32.totalorder 1, %s20
      %p212 = scmp.lt.s32.totalorder %s20, 3
      %p213 = pnand %p211, %p212
      %p214 = pneg %p213
      // Predicated region
      $region9: #{tpu_custom_call.1} parent=5 // pred_check
        _
      $region10: #{tpu_custom_call.1} parent=5 // pred_check_branch
        %216 = sbr.rel (%p213) target = $region12
      $region11: #{tpu_custom_call.1} parent=5 // pred_region
        %s217 = ssub.s32 %s20, 1
        // Predicated region
        $region13: #{tpu_custom_call.1} parent=11 // pred_check
          %p218 = pneg %p67
        $region14: #{tpu_custom_call.1} parent=11 // pred_check_branch
          %220 = sbr.rel (%p218) target = $region16
        $region15: #{tpu_custom_call.1} parent=11 // pred_region
          _
        $region16: #{tpu_custom_call.1} parent=11 // pred_fallthru
          _
        // Predicated region
        $region17: #{tpu_custom_call.1} parent=11 // pred_check
          %p221 = pneg %p88
        $region18: #{tpu_custom_call.1} parent=11 // pred_check_branch
          %223 = sbr.rel (%p221) target = $region20
        $region19: #{tpu_custom_call.1} parent=11 // pred_region
          _
        $region20: #{tpu_custom_call.1} parent=11 // pred_fallthru
          _
        // Predicated region
        $region21: #{tpu_custom_call.1} parent=11 // pred_check
          %p224 = pneg %p109
        $region22: #{tpu_custom_call.1} parent=11 // pred_check_branch
          %226 = sbr.rel (%p224) target = $region24
        $region23: #{tpu_custom_call.1} parent=11 // pred_region
          _
        $region24: #{tpu_custom_call.1} parent=11 // pred_fallthru
          _
        // Predicated region
        $region25: #{tpu_custom_call.1} parent=11 // pred_check
          %p227 = pneg %p130
        $region26: #{tpu_custom_call.1} parent=11 // pred_check_branch
          %229 = sbr.rel (%p227) target = $region28
        $region27: #{tpu_custom_call.1} parent=11 // pred_region
          _
        $region28: #{tpu_custom_call.1} parent=11 // pred_fallthru
          _
        // Predicated region
        $region29: #{tpu_custom_call.1} parent=11 // pred_check
          %p230 = pneg %p151
        $region30: #{tpu_custom_call.1} parent=11 // pred_check_branch
          %232 = sbr.rel (%p230) target = $region32
        $region31: #{tpu_custom_call.1} parent=11 // pred_region
          _
        $region32: #{tpu_custom_call.1} parent=11 // pred_fallthru
          _
      $region12: #{tpu_custom_call.1} parent=5 // pred_fallthru
        _
      %p233 = scmp.lt.s32.totalorder %s20, 2
      // Predicated region
      $region33: #{tpu_custom_call.1} parent=5 // pred_check
        %p234 = pneg %p233
      $region34: #{tpu_custom_call.1} parent=5 // pred_check_branch
        %236 = sbr.rel (%p234) target = $region36
      $region35: #{tpu_custom_call.1} parent=5 // pred_region
        // Predicated region
        $region37: #{tpu_custom_call.1} parent=35 // pred_check
          %p237 = pneg %p40
        $region38: #{tpu_custom_call.1} parent=35 // pred_check_branch
          %239 = sbr.rel (%p237) target = $region40
        $region39: #{tpu_custom_call.1} parent=35 // pred_region
          %p240 = scmp.lt.s32.totalorder %s20, 1
          %s241 = scalar_select %p240, %s20, 1
          %s242 = smul.addr %s241, 8
          %s243 = scalar_lea.vmem %s0, %s242
        $region40: #{tpu_custom_call.1} parent=35 // pred_fallthru
          _
      $region36: #{tpu_custom_call.1} parent=5 // pred_fallthru
        _
      %p244 = scmp.le.s32.totalorder 1, %s20
      %p245 = scmp.lt.s32.totalorder %s20, 3
      %p246 = pnand %p244, %p245
      %p247 = pneg %p246
      // Predicated region
      $region41: #{tpu_custom_call.1} parent=5 // pred_check
        _
      $region42: #{tpu_custom_call.1} parent=5 // pred_check_branch
        %249 = sbr.rel (%p246) target = $region44
      $region43: #{tpu_custom_call.1} parent=5 // pred_region
        %s250 = ssub.s32 %s20, 1
        %p251 = scmp.lt.s32.totalorder %s25, 1
        %s252 = scalar_select %p251, %s25, 1
        %s253 = smul.addr %s252, 8
        %s254 = scalar_lea.vmem %s0, %s253
        %p255 = pneg %p46
        %p256 = pneg %p43
        %p257 = pneg %p67
        %p258 = pneg %p64
        %p259 = pneg %p88
        %p260 = pneg %p85
        %p261 = pneg %p109
        %p262 = pneg %p106
        %p263 = pneg %p130
        %p264 = pneg %p127
        %p265 = pneg %p151
        %p266 = pneg %p148
        %p267 = pneg %p177
        %p268 = pneg %p174
        %s269 = sand.u32 %s164, 1
        %s270 = scalar_lea.sflag [#allocation3], %s269
        %s271 = sand.u32 %s164, 1
        %s272 = smul.addr %s271, 8
        %s273 = scalar_lea.vmem [#allocation2], %s272
        %p274 = pneg %p203
        %p275 = pneg %p200
        %s276 = sand.u32 %s190, 1
        %s277 = scalar_lea.sflag [#allocation5], %s276
        %s278 = sand.u32 %s190, 1
        %s279 = smul.addr %s278, 32
        %s280 = scalar_lea.vmem [#allocation4], %s279
        %p281 = scmp.lt.s32.totalorder %s25, 1
        %s282 = scalar_select %p281, %s25, 1
        %s283 = smul.addr %s282, 8
        %s284 = scalar_lea.vmem %s0, %s283
        %v285 = vld [vmem:[%s284] sm:$0xff]
        %v286 = vld [vmem:[%s1] sm:$0xff]
        %v287 = vld [vmem:[%s1 + $0x8] sm:$0xff]
        %v288 = vld [vmem:[%s1 + $0x10] sm:$0xff]
        %v289 = vld [vmem:[%s1 + $0x18] sm:$0xff]
        %vm290 = vcmask 261120
        %v292 = vsel %vm290, %v285, 0
        %294 = vmatprep.subr.mxu0 0.0
        %295 = vmatpush1.msra.mxu0 %v286
        %296 = vmatprep.subr.mxu0 0.0
        %297 = vmatpush1.msra.mxu0 %v287
        %298 = vmatprep.subr.mxu0 0.0
        %299 = vmatpush1.msra.mxu0 %v288
        %300 = vmatprep.subr.mxu0 0.0
        %301 = vmatpush1.msra.mxu0 %v289
        %302 = vmatprep.subr.mxu0 0.0
        %303 = vmatpush1.msra.mxu0 0.0
        %304 = vmatprep.subr.mxu0 0.0
        %305 = vmatpush1.msra.mxu0 0.0
        %306 = vmatprep.subr.mxu0 0.0
        %307 = vmatpush1.msra.mxu0 0.0
        %308 = vmatprep.subr.mxu0 0.0
        %309 = vmatpush1.msra.mxu0 0.0
        %310 = vmatprep.subr.mxu0 0.0
        %311 = vmatpush1.msra.mxu0 0.0
        %312 = vmatprep.subr.mxu0 0.0
        %313 = vmatpush1.msra.mxu0 0.0
        %314 = vmatprep.subr.mxu0 0.0
        %315 = vmatpush1.msra.mxu0 0.0
        %316 = vmatprep.subr.mxu0 0.0
        %317 = vmatpush1.msra.mxu0 0.0
        %318 = vmatprep.subr.mxu0 0.0
        %319 = vmatpush1.msra.mxu0 0.0
        %320 = vmatprep.subr.mxu0 0.0
        %321 = vmatpush1.msra.mxu0 0.0
        %322 = vmatprep.subr.mxu0 0.0
        %323 = vmatpush1.msra.mxu0 0.0
        %324 = vmatprep.subr.mxu0 0.0
        %325 = vmatpush1.msra.mxu0 0.0
        %326 = vmatprep.subr.mxu0 0.0
        %327 = vmatpush1.msra.mxu0 0.0
        %328 = vmatprep.subr.mxu0 0.0
        %329 = vmatpush1.msra.mxu0 0.0
        %330 = vmatprep.subr.mxu0 0.0
        %331 = vmatpush1.msra.mxu0 0.0
        %332 = vmatprep.subr.mxu0 0.0
        %333 = vmatpush1.msra.mxu0 0.0
        %334 = vmatprep.subr.mxu0 0.0
        %335 = vmatpush1.msra.mxu0 0.0
        %336 = vmatprep.subr.mxu0 0.0
        %337 = vmatpush1.msra.mxu0 0.0
        %338 = vmatprep.subr.mxu0 0.0
        %339 = vmatpush1.msra.mxu0 0.0
        %340 = vmatprep.subr.mxu0 0.0
        %341 = vmatpush1.msra.mxu0 0.0
        %342 = vmatprep.subr.mxu0 0.0
        %343 = vmatpush1.msra.mxu0 0.0
        %344 = vmatprep.subr.mxu0 0.0
        %345 = vmatpush1.msra.mxu0 0.0
        %346 = vmatprep.subr.mxu0 0.0
        %347 = vmatpush1.msra.mxu0 0.0
        %348 = vmatprep.subr.mxu0 0.0
        %349 = vmatpush1.msra.mxu0 0.0
        %350 = vmatprep.subr.mxu0 0.0
        %351 = vmatpush1.msra.mxu0 0.0
        %352 = vmatprep.subr.mxu0 0.0
        %353 = vmatpush1.msra.mxu0 0.0
        %354 = vmatprep.subr.mxu0 0.0
        %355 = vmatpush1.msra.mxu0 0.0
        %356 = vmatprep.subr.mxu0 0.0
        %357 = vmatpush1.msra.mxu0 0.0
        %358 = vmatprep.mubr.f32.mxu0 0.0
        %359 = vmatmul.mubr.f32.gmra.mrb[0].mxu0 %v292
        %v360 = vpop.f32.mrb[0].mxu0
        %v361 = vadd.f32 0.0, %v360
        %v362 = vpop.f32.mrb[0].mxu0
        %363 = vdwg.mxu0
        %v364 = vmul.f32 %v361, 0.25
        %v365 = vld [vmem:[%s2] sm:$0xff]
        %v366 = vld [vmem:[%s2 + $0x8] sm:$0xff]
        %v367 = vld [vmem:[%s2 + $0x10] sm:$0xff]
        %v368 = vld [vmem:[%s2 + $0x18] sm:$0xff]
        %369 = vmatprep.subr.mxu0 0.0
        %370 = vmatpush1.msra.mxu0 %v365
        %371 = vmatprep.subr.mxu0 0.0
        %372 = vmatpush1.msra.mxu0 %v366
        %373 = vmatprep.subr.mxu0 0.0
        %374 = vmatpush1.msra.mxu0 %v367
        %375 = vmatprep.subr.mxu0 0.0
        %376 = vmatpush1.msra.mxu0 %v368
        %377 = vmatprep.subr.mxu0 0.0
        %378 = vmatpush1.msra.mxu0 0.0
        %379 = vmatprep.subr.mxu0 0.0
        %380 = vmatpush1.msra.mxu0 0.0
        %381 = vmatprep.subr.mxu0 0.0
        %382 = vmatpush1.msra.mxu0 0.0
        %383 = vmatprep.subr.mxu0 0.0
        %384 = vmatpush1.msra.mxu0 0.0
        %385 = vmatprep.subr.mxu0 0.0
        %386 = vmatpush1.msra.mxu0 0.0
        %387 = vmatprep.subr.mxu0 0.0
        %388 = vmatpush1.msra.mxu0 0.0
        %389 = vmatprep.subr.mxu0 0.0
        %390 = vmatpush1.msra.mxu0 0.0
        %391 = vmatprep.subr.mxu0 0.0
        %392 = vmatpush1.msra.mxu0 0.0
        %393 = vmatprep.subr.mxu0 0.0
        %394 = vmatpush1.msra.mxu0 0.0
        %395 = vmatprep.subr.mxu0 0.0
        %396 = vmatpush1.msra.mxu0 0.0
        %397 = vmatprep.subr.mxu0 0.0
        %398 = vmatpush1.msra.mxu0 0.0
        %399 = vmatprep.subr.mxu0 0.0
        %400 = vmatpush1.msra.mxu0 0.0
        %401 = vmatprep.subr.mxu0 0.0
        %402 = vmatpush1.msra.mxu0 0.0
        %403 = vmatprep.subr.mxu0 0.0
        %404 = vmatpush1.msra.mxu0 0.0
        %405 = vmatprep.subr.mxu0 0.0
        %406 = vmatpush1.msra.mxu0 0.0
        %407 = vmatprep.subr.mxu0 0.0
        %408 = vmatpush1.msra.mxu0 0.0
        %409 = vmatprep.subr.mxu0 0.0
        %410 = vmatpush1.msra.mxu0 0.0
        %411 = vmatprep.subr.mxu0 0.0
        %412 = vmatpush1.msra.mxu0 0.0
        %413 = vmatprep.subr.mxu0 0.0
        %414 = vmatpush1.msra.mxu0 0.0
        %415 = vmatprep.subr.mxu0 0.0
        %416 = vmatpush1.msra.mxu0 0.0
        %417 = vmatprep.subr.mxu0 0.0
        %418 = vmatpush1.msra.mxu0 0.0
        %419 = vmatprep.subr.mxu0 0.0
        %420 = vmatpush1.msra.mxu0 0.0
        %421 = vmatprep.subr.mxu0 0.0
        %422 = vmatpush1.msra.mxu0 0.0
        %423 = vmatprep.subr.mxu0 0.0
        %424 = vmatpush1.msra.mxu0 0.0
        %425 = vmatprep.subr.mxu0 0.0
        %426 = vmatpush1.msra.mxu0 0.0
        %427 = vmatprep.subr.mxu0 0.0
        %428 = vmatpush1.msra.mxu0 0.0
        %429 = vmatprep.subr.mxu0 0.0
        %430 = vmatpush1.msra.mxu0 0.0
        %431 = vmatprep.subr.mxu0 0.0
        %432 = vmatpush1.msra.mxu0 0.0
        %433 = vmatprep.mubr.f32.mxu0 0.0
        %434 = vmatmul.mubr.f32.gmra.mrb[0].mxu0 %v292
        %v435 = vpop.f32.mrb[0].mxu0
        %v436 = vadd.f32 0.0, %v435
        %v437 = vpop.f32.mrb[0].mxu0
        %438 = vdwg.mxu0
        %v439 = vld [vmem:[%s3] sm:$0xff]
        %v440 = vld [vmem:[%s3 + $0x8] sm:$0xff]
        %v441 = vld [vmem:[%s3 + $0x10] sm:$0xff]
        %v442 = vld [vmem:[%s3 + $0x18] sm:$0xff]
        %443 = vmatprep.subr.mxu0 0.0
        %444 = vmatpush1.msra.mxu0 %v439
        %445 = vmatprep.subr.mxu0 0.0
        %446 = vmatpush1.msra.mxu0 %v440
        %447 = vmatprep.subr.mxu0 0.0
        %448 = vmatpush1.msra.mxu0 %v441
        %449 = vmatprep.subr.mxu0 0.0
        %450 = vmatpush1.msra.mxu0 %v442
        %451 = vmatprep.subr.mxu0 0.0
        %452 = vmatpush1.msra.mxu0 0.0
        %453 = vmatprep.subr.mxu0 0.0
        %454 = vmatpush1.msra.mxu0 0.0
        %455 = vmatprep.subr.mxu0 0.0
        %456 = vmatpush1.msra.mxu0 0.0
        %457 = vmatprep.subr.mxu0 0.0
        %458 = vmatpush1.msra.mxu0 0.0
        %459 = vmatprep.subr.mxu0 0.0
        %460 = vmatpush1.msra.mxu0 0.0
        %461 = vmatprep.subr.mxu0 0.0
        %462 = vmatpush1.msra.mxu0 0.0
        %463 = vmatprep.subr.mxu0 0.0
        %464 = vmatpush1.msra.mxu0 0.0
        %465 = vmatprep.subr.mxu0 0.0
        %466 = vmatpush1.msra.mxu0 0.0
        %467 = vmatprep.subr.mxu0 0.0
        %468 = vmatpush1.msra.mxu0 0.0
        %469 = vmatprep.subr.mxu0 0.0
        %470 = vmatpush1.msra.mxu0 0.0
        %471 = vmatprep.subr.mxu0 0.0
        %472 = vmatpush1.msra.mxu0 0.0
        %473 = vmatprep.subr.mxu0 0.0
        %474 = vmatpush1.msra.mxu0 0.0
        %475 = vmatprep.subr.mxu0 0.0
        %476 = vmatpush1.msra.mxu0 0.0
        %477 = vmatprep.subr.mxu0 0.0
        %478 = vmatpush1.msra.mxu0 0.0
        %479 = vmatprep.subr.mxu0 0.0
        %480 = vmatpush1.msra.mxu0 0.0
        %481 = vmatprep.subr.mxu0 0.0
        %482 = vmatpush1.msra.mxu0 0.0
        %483 = vmatprep.subr.mxu0 0.0
        %484 = vmatpush1.msra.mxu0 0.0
        %485 = vmatprep.subr.mxu0 0.0
        %486 = vmatpush1.msra.mxu0 0.0
        %487 = vmatprep.subr.mxu0 0.0
        %488 = vmatpush1.msra.mxu0 0.0
        %489 = vmatprep.subr.mxu0 0.0
        %490 = vmatpush1.msra.mxu0 0.0
        %491 = vmatprep.subr.mxu0 0.0
        %492 = vmatpush1.msra.mxu0 0.0
        %493 = vmatprep.subr.mxu0 0.0
        %494 = vmatpush1.msra.mxu0 0.0
        %495 = vmatprep.subr.mxu0 0.0
        %496 = vmatpush1.msra.mxu0 0.0
        %497 = vmatprep.subr.mxu0 0.0
        %498 = vmatpush1.msra.mxu0 0.0
        %499 = vmatprep.subr.mxu0 0.0
        %500 = vmatpush1.msra.mxu0 0.0
        %501 = vmatprep.subr.mxu0 0.0
        %502 = vmatpush1.msra.mxu0 0.0
        %503 = vmatprep.subr.mxu0 0.0
        %504 = vmatpush1.msra.mxu0 0.0
        %505 = vmatprep.subr.mxu0 0.0
        %506 = vmatpush1.msra.mxu0 0.0
        %507 = vmatprep.mubr.f32.mxu0 0.0
        %508 = vmatmul.mubr.f32.gmra.mrb[0].mxu0 %v292
        %v509 = vpop.f32.mrb[0].mxu0
        %v510 = vadd.f32 0.0, %v509
        %v511 = vpop.f32.mrb[0].mxu0
        %512 = vdwg.mxu0
        %vm513 = vcmask 130048
        %v515 = vsel %vm513, %v364, 0
        %v518 = vsel %vm513, %v436, 0
        %520 = vmatprep.subr.mxu0 0.0
        %521 = vmatpush1.xpose.msra.mxu0 %v518
        %522 = vmatprep.subr.mxu0 0.0
        %523 = vmatpush1.xpose.msra.mxu0 0.0
        %524 = vmatprep.subr.mxu0 0.0
        %525 = vmatpush1.xpose.msra.mxu0 0.0
        %526 = vmatprep.subr.mxu0 0.0
        %527 = vmatpush1.xpose.msra.mxu0 0.0
        %528 = vmatprep.subr.mxu0 0.0
        %529 = vmatpush1.xpose.msra.mxu0 0.0
        %530 = vmatprep.subr.mxu0 0.0
        %531 = vmatpush1.xpose.msra.mxu0 0.0
        %532 = vmatprep.subr.mxu0 0.0
        %533 = vmatpush1.xpose.msra.mxu0 0.0
        %534 = vmatprep.subr.mxu0 0.0
        %535 = vmatpush1.xpose.msra.mxu0 0.0
        %536 = vmatprep.subr.mxu0 0.0
        %537 = vmatpush1.xpose.msra.mxu0 0.0
        %538 = vmatprep.subr.mxu0 0.0
        %539 = vmatpush1.xpose.msra.mxu0 0.0
        %540 = vmatprep.subr.mxu0 0.0
        %541 = vmatpush1.xpose.msra.mxu0 0.0
        %542 = vmatprep.subr.mxu0 0.0
        %543 = vmatpush1.xpose.msra.mxu0 0.0
        %544 = vmatprep.subr.mxu0 0.0
        %545 = vmatpush1.xpose.msra.mxu0 0.0
        %546 = vmatprep.subr.mxu0 0.0
        %547 = vmatpush1.xpose.msra.mxu0 0.0
        %548 = vmatprep.subr.mxu0 0.0
        %549 = vmatpush1.xpose.msra.mxu0 0.0
        %550 = vmatprep.subr.mxu0 0.0
        %551 = vmatpush1.xpose.msra.mxu0 0.0
        %552 = vmatprep.subr.mxu0 0.0
        %553 = vmatpush1.xpose.msra.mxu0 0.0
        %554 = vmatprep.subr.mxu0 0.0
        %555 = vmatpush1.xpose.msra.mxu0 0.0
        %556 = vmatprep.subr.mxu0 0.0
        %557 = vmatpush1.xpose.msra.mxu0 0.0
        %558 = vmatprep.subr.mxu0 0.0
        %559 = vmatpush1.xpose.msra.mxu0 0.0
        %560 = vmatprep.subr.mxu0 0.0
        %561 = vmatpush1.xpose.msra.mxu0 0.0
        %562 = vmatprep.subr.mxu0 0.0
        %563 = vmatpush1.xpose.msra.mxu0 0.0
        %564 = vmatprep.subr.mxu0 0.0
        %565 = vmatpush1.xpose.msra.mxu0 0.0
        %566 = vmatprep.subr.mxu0 0.0
        %567 = vmatpush1.xpose.msra.mxu0 0.0
        %568 = vmatprep.subr.mxu0 0.0
        %569 = vmatpush1.xpose.msra.mxu0 0.0
        %570 = vmatprep.subr.mxu0 0.0
        %571 = vmatpush1.xpose.msra.mxu0 0.0
        %572 = vmatprep.subr.mxu0 0.0
        %573 = vmatpush1.xpose.msra.mxu0 0.0
        %574 = vmatprep.subr.mxu0 0.0
        %575 = vmatpush1.xpose.msra.mxu0 0.0
        %576 = vmatprep.subr.mxu0 0.0
        %577 = vmatpush1.xpose.msra.mxu0 0.0
        %578 = vmatprep.subr.mxu0 0.0
        %579 = vmatpush1.xpose.msra.mxu0 0.0
        %580 = vmatprep.subr.mxu0 0.0
        %581 = vmatpush1.xpose.msra.mxu0 0.0
        %582 = vmatprep.subr.mxu0 0.0
        %583 = vmatpush1.xpose.msra.mxu0 0.0
        %584 = vmatprep.mubr.f32.mxu0 0.0
        %585 = vmatmul.mubr.f32.gmra.mrb[0].mxu0 %v515
        %v586 = vpop.f32.mrb[0].mxu0
        %v587 = vadd.f32 0.0, %v586
        %v588 = vpop.f32.mrb[0].mxu0
        %589 = vdwg.mxu0
        %vm590 = vcmask 64512
        %v591 = vsel %vm590, %v587, -inf
        %592 = vmax.xlane.f32.xlu0 %v591
        %v593 = vpop.xlane.xlu0 %592
        %v594 = vsub.f32 %v587, %v593
        %v595 = vmul.f32 %v594, 1.442695
        %v596 = vpow.pop %v595
        %v597 = vsel %vm590, %v596, 0.0
        %598 = vadd.xlane.f32.xlu0 %v597
        %v599 = vpop.xlane.xlu0 %598
        %v600 = vrcp.pop %v599
        %v601 = vmul.f32 %v596, %v600
        %602 = vst.msk [vmem:[%s280] sm:$0xff] %vm590, %v601
        %v604 = vsel %vm590, %v601, 0
        %606 = vmatprep.subr.mxu0 0.0
        %607 = vmatpush1.msra.mxu0 %v510
        %608 = vmatprep.subr.mxu0 0.0
        %609 = vmatpush1.msra.mxu0 0.0
        %610 = vmatprep.subr.mxu0 0.0
        %611 = vmatpush1.msra.mxu0 0.0
        %612 = vmatprep.subr.mxu0 0.0
        %613 = vmatpush1.msra.mxu0 0.0
        %614 = vmatprep.subr.mxu0 0.0
        %615 = vmatpush1.msra.mxu0 0.0
        %616 = vmatprep.subr.mxu0 0.0
        %617 = vmatpush1.msra.mxu0 0.0
        %618 = vmatprep.subr.mxu0 0.0
        %619 = vmatpush1.msra.mxu0 0.0
        %620 = vmatprep.subr.mxu0 0.0
        %621 = vmatpush1.msra.mxu0 0.0
        %622 = vmatprep.subr.mxu0 0.0
        %623 = vmatpush1.msra.mxu0 0.0
        %624 = vmatprep.subr.mxu0 0.0
        %625 = vmatpush1.msra.mxu0 0.0
        %626 = vmatprep.subr.mxu0 0.0
        %627 = vmatpush1.msra.mxu0 0.0
        %628 = vmatprep.subr.mxu0 0.0
        %629 = vmatpush1.msra.mxu0 0.0
        %630 = vmatprep.subr.mxu0 0.0
        %631 = vmatpush1.msra.mxu0 0.0
        %632 = vmatprep.subr.mxu0 0.0
        %633 = vmatpush1.msra.mxu0 0.0
        %634 = vmatprep.subr.mxu0 0.0
        %635 = vmatpush1.msra.mxu0 0.0
        %636 = vmatprep.subr.mxu0 0.0
        %637 = vmatpush1.msra.mxu0 0.0
        %638 = vmatprep.subr.mxu0 0.0
        %639 = vmatpush1.msra.mxu0 0.0
        %640 = vmatprep.subr.mxu0 0.0
        %641 = vmatpush1.msra.mxu0 0.0
        %642 = vmatprep.subr.mxu0 0.0
        %643 = vmatpush1.msra.mxu0 0.0
        %644 = vmatprep.subr.mxu0 0.0
        %645 = vmatpush1.msra.mxu0 0.0
        %646 = vmatprep.subr.mxu0 0.0
        %647 = vmatpush1.msra.mxu0 0.0
        %648 = vmatprep.subr.mxu0 0.0
        %649 = vmatpush1.msra.mxu0 0.0
        %650 = vmatprep.subr.mxu0 0.0
        %651 = vmatpush1.msra.mxu0 0.0
        %652 = vmatprep.subr.mxu0 0.0
        %653 = vmatpush1.msra.mxu0 0.0
        %654 = vmatprep.subr.mxu0 0.0
        %655 = vmatpush1.msra.mxu0 0.0
        %656 = vmatprep.subr.mxu0 0.0
        %657 = vmatpush1.msra.mxu0 0.0
        %658 = vmatprep.subr.mxu0 0.0
        %659 = vmatpush1.msra.mxu0 0.0
        %660 = vmatprep.subr.mxu0 0.0
        %661 = vmatpush1.msra.mxu0 0.0
        %662 = vmatprep.subr.mxu0 0.0
        %663 = vmatpush1.msra.mxu0 0.0
        %664 = vmatprep.subr.mxu0 0.0
        %665 = vmatpush1.msra.mxu0 0.0
        %666 = vmatprep.subr.mxu0 0.0
        %667 = vmatpush1.msra.mxu0 0.0
        %668 = vmatprep.subr.mxu0 0.0
        %669 = vmatpush1.msra.mxu0 0.0
        %670 = vmatprep.mubr.f32.mxu0 0.0
        %671 = vmatmul.mubr.f32.gmra.mrb[0].mxu0 %v604
        %v672 = vpop.f32.mrb[0].mxu0
        %v673 = vadd.f32 0.0, %v672
        %v674 = vpop.f32.mrb[0].mxu0
        %675 = vdwg.mxu0
        %v676 = vld [vmem:[%s4] sm:$0xff]
        %v677 = vld [vmem:[%s4 + $0x8] sm:$0xff]
        %s678 = scalar_lea.vmem %s1, 32
        %v679 = vld [vmem:[%s678] sm:$0xff]
        %v680 = vld [vmem:[%s678 + $0x8] sm:$0xff]
        %v681 = vld [vmem:[%s678 + $0x10] sm:$0xff]
        %v682 = vld [vmem:[%s678 + $0x18] sm:$0xff]
        %683 = vmatprep.subr.mxu0 0.0
        %684 = vmatpush1.msra.mxu0 %v679
        %685 = vmatprep.subr.mxu0 0.0
        %686 = vmatpush1.msra.mxu0 %v680
        %687 = vmatprep.subr.mxu0 0.0
        %688 = vmatpush1.msra.mxu0 %v681
        %689 = vmatprep.subr.mxu0 0.0
        %690 = vmatpush1.msra.mxu0 %v682
        %691 = vmatprep.subr.mxu0 0.0
        %692 = vmatpush1.msra.mxu0 0.0
        %693 = vmatprep.subr.mxu0 0.0
        %694 = vmatpush1.msra.mxu0 0.0
        %695 = vmatprep.subr.mxu0 0.0
        %696 = vmatpush1.msra.mxu0 0.0
        %697 = vmatprep.subr.mxu0 0.0
        %698 = vmatpush1.msra.mxu0 0.0
        %699 = vmatprep.subr.mxu0 0.0
        %700 = vmatpush1.msra.mxu0 0.0
        %701 = vmatprep.subr.mxu0 0.0
        %702 = vmatpush1.msra.mxu0 0.0
        %703 = vmatprep.subr.mxu0 0.0
        %704 = vmatpush1.msra.mxu0 0.0
        %705 = vmatprep.subr.mxu0 0.0
        %706 = vmatpush1.msra.mxu0 0.0
        %707 = vmatprep.subr.mxu0 0.0
        %708 = vmatpush1.msra.mxu0 0.0
        %709 = vmatprep.subr.mxu0 0.0
        %710 = vmatpush1.msra.mxu0 0.0
        %711 = vmatprep.subr.mxu0 0.0
        %712 = vmatpush1.msra.mxu0 0.0
        %713 = vmatprep.subr.mxu0 0.0
        %714 = vmatpush1.msra.mxu0 0.0
        %715 = vmatprep.subr.mxu0 0.0
        %716 = vmatpush1.msra.mxu0 0.0
        %717 = vmatprep.subr.mxu0 0.0
        %718 = vmatpush1.msra.mxu0 0.0
        %719 = vmatprep.subr.mxu0 0.0
        %720 = vmatpush1.msra.mxu0 0.0
        %721 = vmatprep.subr.mxu0 0.0
        %722 = vmatpush1.msra.mxu0 0.0
        %723 = vmatprep.subr.mxu0 0.0
        %724 = vmatpush1.msra.mxu0 0.0
        %725 = vmatprep.subr.mxu0 0.0
        %726 = vmatpush1.msra.mxu0 0.0
        %727 = vmatprep.subr.mxu0 0.0
        %728 = vmatpush1.msra.mxu0 0.0
        %729 = vmatprep.subr.mxu0 0.0
        %730 = vmatpush1.msra.mxu0 0.0
        %731 = vmatprep.subr.mxu0 0.0
        %732 = vmatpush1.msra.mxu0 0.0
        %733 = vmatprep.subr.mxu0 0.0
        %734 = vmatpush1.msra.mxu0 0.0
        %735 = vmatprep.subr.mxu0 0.0
        %736 = vmatpush1.msra.mxu0 0.0
        %737 = vmatprep.subr.mxu0 0.0
        %738 = vmatpush1.msra.mxu0 0.0
        %739 = vmatprep.subr.mxu0 0.0
        %740 = vmatpush1.msra.mxu0 0.0
        %741 = vmatprep.subr.mxu0 0.0
        %742 = vmatpush1.msra.mxu0 0.0
        %743 = vmatprep.subr.mxu0 0.0
        %744 = vmatpush1.msra.mxu0 0.0
        %745 = vmatprep.subr.mxu0 0.0
        %746 = vmatpush1.msra.mxu0 0.0
        %747 = vmatprep.mubr.f32.mxu0 0.0
        %748 = vmatmul.mubr.f32.gmra.mrb[0].mxu0 %v292
        %v749 = vpop.f32.mrb[0].mxu0
        %v750 = vadd.f32 0.0, %v749
        %v751 = vpop.f32.mrb[0].mxu0
        %752 = vdwg.mxu0
        %v753 = vmul.f32 %v750, 0.25
        %s754 = scalar_lea.vmem %s2, 32
        %v755 = vld [vmem:[%s754] sm:$0xff]
        %v756 = vld [vmem:[%s754 + $0x8] sm:$0xff]
        %v757 = vld [vmem:[%s754 + $0x10] sm:$0xff]
        %v758 = vld [vmem:[%s754 + $0x18] sm:$0xff]
        %759 = vmatprep.subr.mxu0 0.0
        %760 = vmatpush1.msra.mxu0 %v755
        %761 = vmatprep.subr.mxu0 0.0
        %762 = vmatpush1.msra.mxu0 %v756
        %763 = vmatprep.subr.mxu0 0.0
        %764 = vmatpush1.msra.mxu0 %v757
        %765 = vmatprep.subr.mxu0 0.0
        %766 = vmatpush1.msra.mxu0 %v758
        %767 = vmatprep.subr.mxu0 0.0
        %768 = vmatpush1.msra.mxu0 0.0
        %769 = vmatprep.subr.mxu0 0.0
        %770 = vmatpush1.msra.mxu0 0.0
        %771 = vmatprep.subr.mxu0 0.0
        %772 = vmatpush1.msra.mxu0 0.0
        %773 = vmatprep.subr.mxu0 0.0
        %774 = vmatpush1.msra.mxu0 0.0
        %775 = vmatprep.subr.mxu0 0.0
        %776 = vmatpush1.msra.mxu0 0.0
        %777 = vmatprep.subr.mxu0 0.0
        %778 = vmatpush1.msra.mxu0 0.0
        %779 = vmatprep.subr.mxu0 0.0
        %780 = vmatpush1.msra.mxu0 0.0
        %781 = vmatprep.subr.mxu0 0.0
        %782 = vmatpush1.msra.mxu0 0.0
        %783 = vmatprep.subr.mxu0 0.0
        %784 = vmatpush1.msra.mxu0 0.0
        %785 = vmatprep.subr.mxu0 0.0
        %786 = vmatpush1.msra.mxu0 0.0
        %787 = vmatprep.subr.mxu0 0.0
        %788 = vmatpush1.msra.mxu0 0.0
        %789 = vmatprep.subr.mxu0 0.0
        %790 = vmatpush1.msra.mxu0 0.0
        %791 = vmatprep.subr.mxu0 0.0
        %792 = vmatpush1.msra.mxu0 0.0
        %793 = vmatprep.subr.mxu0 0.0
        %794 = vmatpush1.msra.mxu0 0.0
        %795 = vmatprep.subr.mxu0 0.0
        %796 = vmatpush1.msra.mxu0 0.0
        %797 = vmatprep.subr.mxu0 0.0
        %798 = vmatpush1.msra.mxu0 0.0
        %799 = vmatprep.subr.mxu0 0.0
        %800 = vmatpush1.msra.mxu0 0.0
        %801 = vmatprep.subr.mxu0 0.0
        %802 = vmatpush1.msra.mxu0 0.0
        %803 = vmatprep.subr.mxu0 0.0
        %804 = vmatpush1.msra.mxu0 0.0
        %805 = vmatprep.subr.mxu0 0.0
        %806 = vmatpush1.msra.mxu0 0.0
        %807 = vmatprep.subr.mxu0 0.0
        %808 = vmatpush1.msra.mxu0 0.0
        %809 = vmatprep.subr.mxu0 0.0
        %810 = vmatpush1.msra.mxu0 0.0
        %811 = vmatprep.subr.mxu0 0.0
        %812 = vmatpush1.msra.mxu0 0.0
        %813 = vmatprep.subr.mxu0 0.0
        %814 = vmatpush1.msra.mxu0 0.0
        %815 = vmatprep.subr.mxu0 0.0
        %816 = vmatpush1.msra.mxu0 0.0
        %817 = vmatprep.subr.mxu0 0.0
        %818 = vmatpush1.msra.mxu0 0.0
        %819 = vmatprep.subr.mxu0 0.0
        %820 = vmatpush1.msra.mxu0 0.0
        %821 = vmatprep.subr.mxu0 0.0
        %822 = vmatpush1.msra.mxu0 0.0
        %823 = vmatprep.mubr.f32.mxu0 0.0
        %824 = vmatmul.mubr.f32.gmra.mrb[0].mxu0 %v292
        %v825 = vpop.f32.mrb[0].mxu0
        %v826 = vadd.f32 0.0, %v825
        %v827 = vpop.f32.mrb[0].mxu0
        %828 = vdwg.mxu0
        %s829 = scalar_lea.vmem %s3, 32
        %v830 = vld [vmem:[%s829] sm:$0xff]
        %v831 = vld [vmem:[%s829 + $0x8] sm:$0xff]
        %v832 = vld [vmem:[%s829 + $0x10] sm:$0xff]
        %v833 = vld [vmem:[%s829 + $0x18] sm:$0xff]
        %834 = vmatprep.subr.mxu0 0.0
        %835 = vmatpush1.msra.mxu0 %v830
        %836 = vmatprep.subr.mxu0 0.0
        %837 = vmatpush1.msra.mxu0 %v831
        %838 = vmatprep.subr.mxu0 0.0
        %839 = vmatpush1.msra.mxu0 %v832
        %840 = vmatprep.subr.mxu0 0.0
        %841 = vmatpush1.msra.mxu0 %v833
        %842 = vmatprep.subr.mxu0 0.0
        %843 = vmatpush1.msra.mxu0 0.0
        %844 = vmatprep.subr.mxu0 0.0
        %845 = vmatpush1.msra.mxu0 0.0
        %846 = vmatprep.subr.mxu0 0.0
        %847 = vmatpush1.msra.mxu0 0.0
        %848 = vmatprep.subr.mxu0 0.0
        %849 = vmatpush1.msra.mxu0 0.0
        %850 = vmatprep.subr.mxu0 0.0
        %851 = vmatpush1.msra.mxu0 0.0
        %852 = vmatprep.subr.mxu0 0.0
        %853 = vmatpush1.msra.mxu0 0.0
        %854 = vmatprep.subr.mxu0 0.0
        %855 = vmatpush1.msra.mxu0 0.0
        %856 = vmatprep.subr.mxu0 0.0
        %857 = vmatpush1.msra.mxu0 0.0
        %858 = vmatprep.subr.mxu0 0.0
        %859 = vmatpush1.msra.mxu0 0.0
        %860 = vmatprep.subr.mxu0 0.0
        %861 = vmatpush1.msra.mxu0 0.0
        %862 = vmatprep.subr.mxu0 0.0
        %863 = vmatpush1.msra.mxu0 0.0
        %864 = vmatprep.subr.mxu0 0.0
        %865 = vmatpush1.msra.mxu0 0.0
        %866 = vmatprep.subr.mxu0 0.0
        %867 = vmatpush1.msra.mxu0 0.0
        %868 = vmatprep.subr.mxu0 0.0
        %869 = vmatpush1.msra.mxu0 0.0
        %870 = vmatprep.subr.mxu0 0.0
        %871 = vmatpush1.msra.mxu0 0.0
        %872 = vmatprep.subr.mxu0 0.0
        %873 = vmatpush1.msra.mxu0 0.0
        %874 = vmatprep.subr.mxu0 0.0
        %875 = vmatpush1.msra.mxu0 0.0
        %876 = vmatprep.subr.mxu0 0.0
        %877 = vmatpush1.msra.mxu0 0.0
        %878 = vmatprep.subr.mxu0 0.0
        %879 = vmatpush1.msra.mxu0 0.0
        %880 = vmatprep.subr.mxu0 0.0
        %881 = vmatpush1.msra.mxu0 0.0
        %882 = vmatprep.subr.mxu0 0.0
        %883 = vmatpush1.msra.mxu0 0.0
        %884 = vmatprep.subr.mxu0 0.0
        %885 = vmatpush1.msra.mxu0 0.0
        %886 = vmatprep.subr.mxu0 0.0
        %887 = vmatpush1.msra.mxu0 0.0
        %888 = vmatprep.subr.mxu0 0.0
        %889 = vmatpush1.msra.mxu0 0.0
        %890 = vmatprep.subr.mxu0 0.0
        %891 = vmatpush1.msra.mxu0 0.0
        %892 = vmatprep.subr.mxu0 0.0
        %893 = vmatpush1.msra.mxu0 0.0
        %894 = vmatprep.subr.mxu0 0.0
        %895 = vmatpush1.msra.mxu0 0.0
        %896 = vmatprep.subr.mxu0 0.0
        %897 = vmatpush1.msra.mxu0 0.0
        %898 = vmatprep.mubr.f32.mxu0 0.0
        %899 = vmatmul.mubr.f32.gmra.mrb[0].mxu0 %v292
        %v900 = vpop.f32.mrb[0].mxu0
        %v901 = vadd.f32 0.0, %v900
        %v902 = vpop.f32.mrb[0].mxu0
        %903 = vdwg.mxu0
        %v905 = vsel %vm513, %v753, 0
        %v908 = vsel %vm513, %v826, 0
        %910 = vmatprep.subr.mxu0 0.0
        %911 = vmatpush1.xpose.msra.mxu0 %v908
        %912 = vmatprep.subr.mxu0 0.0
        %913 = vmatpush1.xpose.msra.mxu0 0.0
        %914 = vmatprep.subr.mxu0 0.0
        %915 = vmatpush1.xpose.msra.mxu0 0.0
        %916 = vmatprep.subr.mxu0 0.0
        %917 = vmatpush1.xpose.msra.mxu0 0.0
        %918 = vmatprep.subr.mxu0 0.0
        %919 = vmatpush1.xpose.msra.mxu0 0.0
        %920 = vmatprep.subr.mxu0 0.0
        %921 = vmatpush1.xpose.msra.mxu0 0.0
        %922 = vmatprep.subr.mxu0 0.0
        %923 = vmatpush1.xpose.msra.mxu0 0.0
        %924 = vmatprep.subr.mxu0 0.0
        %925 = vmatpush1.xpose.msra.mxu0 0.0
        %926 = vmatprep.subr.mxu0 0.0
        %927 = vmatpush1.xpose.msra.mxu0 0.0
        %928 = vmatprep.subr.mxu0 0.0
        %929 = vmatpush1.xpose.msra.mxu0 0.0
        %930 = vmatprep.subr.mxu0 0.0
        %931 = vmatpush1.xpose.msra.mxu0 0.0
        %932 = vmatprep.subr.mxu0 0.0
        %933 = vmatpush1.xpose.msra.mxu0 0.0
        %934 = vmatprep.subr.mxu0 0.0
        %935 = vmatpush1.xpose.msra.mxu0 0.0
        %936 = vmatprep.subr.mxu0 0.0
        %937 = vmatpush1.xpose.msra.mxu0 0.0
        %938 = vmatprep.subr.mxu0 0.0
        %939 = vmatpush1.xpose.msra.mxu0 0.0
        %940 = vmatprep.subr.mxu0 0.0
        %941 = vmatpush1.xpose.msra.mxu0 0.0
        %942 = vmatprep.subr.mxu0 0.0
        %943 = vmatpush1.xpose.msra.mxu0 0.0
        %944 = vmatprep.subr.mxu0 0.0
        %945 = vmatpush1.xpose.msra.mxu0 0.0
        %946 = vmatprep.subr.mxu0 0.0
        %947 = vmatpush1.xpose.msra.mxu0 0.0
        %948 = vmatprep.subr.mxu0 0.0
        %949 = vmatpush1.xpose.msra.mxu0 0.0
        %950 = vmatprep.subr.mxu0 0.0
        %951 = vmatpush1.xpose.msra.mxu0 0.0
        %952 = vmatprep.subr.mxu0 0.0
        %953 = vmatpush1.xpose.msra.mxu0 0.0
        %954 = vmatprep.subr.mxu0 0.0
        %955 = vmatpush1.xpose.msra.mxu0 0.0
        %956 = vmatprep.subr.mxu0 0.0
        %957 = vmatpush1.xpose.msra.mxu0 0.0
        %958 = vmatprep.subr.mxu0 0.0
        %959 = vmatpush1.xpose.msra.mxu0 0.0
        %960 = vmatprep.subr.mxu0 0.0
        %961 = vmatpush1.xpose.msra.mxu0 0.0
        %962 = vmatprep.subr.mxu0 0.0
        %963 = vmatpush1.xpose.msra.mxu0 0.0
        %964 = vmatprep.subr.mxu0 0.0
        %965 = vmatpush1.xpose.msra.mxu0 0.0
        %966 = vmatprep.subr.mxu0 0.0
        %967 = vmatpush1.xpose.msra.mxu0 0.0
        %968 = vmatprep.subr.mxu0 0.0
        %969 = vmatpush1.xpose.msra.mxu0 0.0
        %970 = vmatprep.subr.mxu0 0.0
        %971 = vmatpush1.xpose.msra.mxu0 0.0
        %972 = vmatprep.subr.mxu0 0.0
        %973 = vmatpush1.xpose.msra.mxu0 0.0
        %974 = vmatprep.mubr.f32.mxu0 0.0
        %975 = vmatmul.mubr.f32.gmra.mrb[0].mxu0 %v905
        %v976 = vpop.f32.mrb[0].mxu0
        %v977 = vadd.f32 0.0, %v976
        %v978 = vpop.f32.mrb[0].mxu0
        %979 = vdwg.mxu0
        %v980 = vsel %vm590, %v977, -inf
        %981 = vmax.xlane.f32.xlu0 %v980
        %v982 = vpop.xlane.xlu0 %981
        %v983 = vsub.f32 %v977, %v982
        %v984 = vmul.f32 %v983, 1.442695
        %v985 = vpow.pop %v984
        %v986 = vsel %vm590, %v985, 0.0
        %987 = vadd.xlane.f32.xlu0 %v986
        %v988 = vpop.xlane.xlu0 %987
        %v989 = vrcp.pop %v988
        %v990 = vmul.f32 %v985, %v989
        %s991 = scalar_lea.vmem %s280, 8 [#allocation4]
        %992 = vst.msk [vmem:[%s991] sm:$0xff] %vm590, %v990
        %v994 = vsel %vm590, %v990, 0
        %996 = vmatprep.subr.mxu0 0.0
        %997 = vmatpush1.msra.mxu0 %v901
        %998 = vmatprep.subr.mxu0 0.0
        %999 = vmatpush1.msra.mxu0 0.0
        %1000 = vmatprep.subr.mxu0 0.0
        %1001 = vmatpush1.msra.mxu0 0.0
        %1002 = vmatprep.subr.mxu0 0.0
        %1003 = vmatpush1.msra.mxu0 0.0
        %1004 = vmatprep.subr.mxu0 0.0
        %1005 = vmatpush1.msra.mxu0 0.0
        %1006 = vmatprep.subr.mxu0 0.0
        %1007 = vmatpush1.msra.mxu0 0.0
        %1008 = vmatprep.subr.mxu0 0.0
        %1009 = vmatpush1.msra.mxu0 0.0
        %1010 = vmatprep.subr.mxu0 0.0
        %1011 = vmatpush1.msra.mxu0 0.0
        %1012 = vmatprep.subr.mxu0 0.0
        %1013 = vmatpush1.msra.mxu0 0.0
        %1014 = vmatprep.subr.mxu0 0.0
        %1015 = vmatpush1.msra.mxu0 0.0
        %1016 = vmatprep.subr.mxu0 0.0
        %1017 = vmatpush1.msra.mxu0 0.0
        %1018 = vmatprep.subr.mxu0 0.0
        %1019 = vmatpush1.msra.mxu0 0.0
        %1020 = vmatprep.subr.mxu0 0.0
        %1021 = vmatpush1.msra.mxu0 0.0
        %1022 = vmatprep.subr.mxu0 0.0
        %1023 = vmatpush1.msra.mxu0 0.0
        %1024 = vmatprep.subr.mxu0 0.0
        %1025 = vmatpush1.msra.mxu0 0.0
        %1026 = vmatprep.subr.mxu0 0.0
        %1027 = vmatpush1.msra.mxu0 0.0
        %1028 = vmatprep.subr.mxu0 0.0
        %1029 = vmatpush1.msra.mxu0 0.0
        %1030 = vmatprep.subr.mxu0 0.0
        %1031 = vmatpush1.msra.mxu0 0.0
        %1032 = vmatprep.subr.mxu0 0.0
        %1033 = vmatpush1.msra.mxu0 0.0
        %1034 = vmatprep.subr.mxu0 0.0
        %1035 = vmatpush1.msra.mxu0 0.0
        %1036 = vmatprep.subr.mxu0 0.0
        %1037 = vmatpush1.msra.mxu0 0.0
        %1038 = vmatprep.subr.mxu0 0.0
        %1039 = vmatpush1.msra.mxu0 0.0
        %1040 = vmatprep.subr.mxu0 0.0
        %1041 = vmatpush1.msra.mxu0 0.0
        %1042 = vmatprep.subr.mxu0 0.0
        %1043 = vmatpush1.msra.mxu0 0.0
        %1044 = vmatprep.subr.mxu0 0.0
        %1045 = vmatpush1.msra.mxu0 0.0
        %1046 = vmatprep.subr.mxu0 0.0
        %1047 = vmatpush1.msra.mxu0 0.0
        %1048 = vmatprep.subr.mxu0 0.0
        %1049 = vmatpush1.msra.mxu0 0.0
        %1050 = vmatprep.subr.mxu0 0.0
        %1051 = vmatpush1.msra.mxu0 0.0
        %1052 = vmatprep.subr.mxu0 0.0
        %1053 = vmatpush1.msra.mxu0 0.0
        %1054 = vmatprep.subr.mxu0 0.0
        %1055 = vmatpush1.msra.mxu0 0.0
        %1056 = vmatprep.subr.mxu0 0.0
        %1057 = vmatpush1.msra.mxu0 0.0
        %1058 = vmatprep.subr.mxu0 0.0
        %1059 = vmatpush1.msra.mxu0 0.0
        %1060 = vmatprep.mubr.f32.mxu0 0.0
        %1061 = vmatmul.mubr.f32.gmra.mrb[0].mxu0 %v994
        %v1062 = vpop.f32.mrb[0].mxu0
        %v1063 = vadd.f32 0.0, %v1062
        %v1064 = vpop.f32.mrb[0].mxu0
        %1065 = vdwg.mxu0
        %s1066 = scalar_lea.vmem %s4, 16
        %v1067 = vld [vmem:[%s1066] sm:$0xff]
        %v1068 = vld [vmem:[%s1066 + $0x8] sm:$0xff]
        %v1070 = vsel %vm513, %v1063, 0
        %1072 = vmatprep.subr.mxu0 0.0
        %1073 = vmatpush1.msra.mxu0 %v1067
        %1074 = vmatprep.subr.mxu0 0.0
        %1075 = vmatpush1.msra.mxu0 %v1068
        %1076 = vmatprep.subr.mxu0 0.0
        %1077 = vmatpush1.msra.mxu0 0.0
        %1078 = vmatprep.subr.mxu0 0.0
        %1079 = vmatpush1.msra.mxu0 0.0
        %1080 = vmatprep.subr.mxu0 0.0
        %1081 = vmatpush1.msra.mxu0 0.0
        %1082 = vmatprep.subr.mxu0 0.0
        %1083 = vmatpush1.msra.mxu0 0.0
        %1084 = vmatprep.subr.mxu0 0.0
        %1085 = vmatpush1.msra.mxu0 0.0
        %1086 = vmatprep.subr.mxu0 0.0
        %1087 = vmatpush1.msra.mxu0 0.0
        %1088 = vmatprep.subr.mxu0 0.0
        %1089 = vmatpush1.msra.mxu0 0.0
        %1090 = vmatprep.subr.mxu0 0.0
        %1091 = vmatpush1.msra.mxu0 0.0
        %1092 = vmatprep.subr.mxu0 0.0
        %1093 = vmatpush1.msra.mxu0 0.0
        %1094 = vmatprep.subr.mxu0 0.0
        %1095 = vmatpush1.msra.mxu0 0.0
        %1096 = vmatprep.subr.mxu0 0.0
        %1097 = vmatpush1.msra.mxu0 0.0
        %1098 = vmatprep.subr.mxu0 0.0
        %1099 = vmatpush1.msra.mxu0 0.0
        %1100 = vmatprep.subr.mxu0 0.0
        %1101 = vmatpush1.msra.mxu0 0.0
        %1102 = vmatprep.subr.mxu0 0.0
        %1103 = vmatpush1.msra.mxu0 0.0
        %1104 = vmatprep.subr.mxu0 0.0
        %1105 = vmatpush1.msra.mxu0 0.0
        %1106 = vmatprep.subr.mxu0 0.0
        %1107 = vmatpush1.msra.mxu0 0.0
        %1108 = vmatprep.subr.mxu0 0.0
        %1109 = vmatpush1.msra.mxu0 0.0
        %1110 = vmatprep.subr.mxu0 0.0
        %1111 = vmatpush1.msra.mxu0 0.0
        %1112 = vmatprep.subr.mxu0 0.0
        %1113 = vmatpush1.msra.mxu0 0.0
        %1114 = vmatprep.subr.mxu0 0.0
        %1115 = vmatpush1.msra.mxu0 0.0
        %1116 = vmatprep.subr.mxu0 0.0
        %1117 = vmatpush1.msra.mxu0 0.0
        %1118 = vmatprep.subr.mxu0 0.0
        %1119 = vmatpush1.msra.mxu0 0.0
        %1120 = vmatprep.subr.mxu0 0.0
        %1121 = vmatpush1.msra.mxu0 0.0
        %1122 = vmatprep.subr.mxu0 0.0
        %1123 = vmatpush1.msra.mxu0 0.0
        %1124 = vmatprep.subr.mxu0 0.0
        %1125 = vmatpush1.msra.mxu0 0.0
        %1126 = vmatprep.subr.mxu0 0.0
        %1127 = vmatpush1.msra.mxu0 0.0
        %1128 = vmatprep.subr.mxu0 0.0
        %1129 = vmatpush1.msra.mxu0 0.0
        %1130 = vmatprep.subr.mxu0 0.0
        %1131 = vmatpush1.msra.mxu0 0.0
        %1132 = vmatprep.subr.mxu0 0.0
        %1133 = vmatpush1.msra.mxu0 0.0
        %1134 = vmatprep.subr.mxu0 0.0
        %1135 = vmatpush1.msra.mxu0 0.0
        %1136 = vmatprep.mubr.f32.mxu0 0.0
        %1137 = vmatmul.mubr.f32.gmra.mrb[0].mxu0 %v1070
        %v1138 = vpop.f32.mrb[0].mxu0
        %v1139 = vadd.f32 0.0, %v1138
        %v1140 = vpop.f32.mrb[0].mxu0
        %1141 = vdwg.mxu0
        %v1143 = vsel %vm513, %v673, 0
        %1145 = vmatprep.subr.mxu0 0.0
        %1146 = vmatpush1.msra.mxu0 %v676
        %1147 = vmatprep.subr.mxu0 0.0
        %1148 = vmatpush1.msra.mxu0 %v677
        %1149 = vmatprep.subr.mxu0 0.0
        %1150 = vmatpush1.msra.mxu0 0.0
        %1151 = vmatprep.subr.mxu0 0.0
        %1152 = vmatpush1.msra.mxu0 0.0
        %1153 = vmatprep.subr.mxu0 0.0
        %1154 = vmatpush1.msra.mxu0 0.0
        %1155 = vmatprep.subr.mxu0 0.0
        %1156 = vmatpush1.msra.mxu0 0.0
        %1157 = vmatprep.subr.mxu0 0.0
        %1158 = vmatpush1.msra.mxu0 0.0
        %1159 = vmatprep.subr.mxu0 0.0
        %1160 = vmatpush1.msra.mxu0 0.0
        %1161 = vmatprep.subr.mxu0 0.0
        %1162 = vmatpush1.msra.mxu0 0.0
        %1163 = vmatprep.subr.mxu0 0.0
        %1164 = vmatpush1.msra.mxu0 0.0
        %1165 = vmatprep.subr.mxu0 0.0
        %1166 = vmatpush1.msra.mxu0 0.0
        %1167 = vmatprep.subr.mxu0 0.0
        %1168 = vmatpush1.msra.mxu0 0.0
        %1169 = vmatprep.subr.mxu0 0.0
        %1170 = vmatpush1.msra.mxu0 0.0
        %1171 = vmatprep.subr.mxu0 0.0
        %1172 = vmatpush1.msra.mxu0 0.0
        %1173 = vmatprep.subr.mxu0 0.0
        %1174 = vmatpush1.msra.mxu0 0.0
        %1175 = vmatprep.subr.mxu0 0.0
        %1176 = vmatpush1.msra.mxu0 0.0
        %1177 = vmatprep.subr.mxu0 0.0
        %1178 = vmatpush1.msra.mxu0 0.0
        %1179 = vmatprep.subr.mxu0 0.0
        %1180 = vmatpush1.msra.mxu0 0.0
        %1181 = vmatprep.subr.mxu0 0.0
        %1182 = vmatpush1.msra.mxu0 0.0
        %1183 = vmatprep.subr.mxu0 0.0
        %1184 = vmatpush1.msra.mxu0 0.0
        %1185 = vmatprep.subr.mxu0 0.0
        %1186 = vmatpush1.msra.mxu0 0.0
        %1187 = vmatprep.subr.mxu0 0.0
        %1188 = vmatpush1.msra.mxu0 0.0
        %1189 = vmatprep.subr.mxu0 0.0
        %1190 = vmatpush1.msra.mxu0 0.0
        %1191 = vmatprep.subr.mxu0 0.0
        %1192 = vmatpush1.msra.mxu0 0.0
        %1193 = vmatprep.subr.mxu0 0.0
        %1194 = vmatpush1.msra.mxu0 0.0
        %1195 = vmatprep.subr.mxu0 0.0
        %1196 = vmatpush1.msra.mxu0 0.0
        %1197 = vmatprep.subr.mxu0 0.0
        %1198 = vmatpush1.msra.mxu0 0.0
        %1199 = vmatprep.subr.mxu0 0.0
        %1200 = vmatpush1.msra.mxu0 0.0
        %1201 = vmatprep.subr.mxu0 0.0
        %1202 = vmatpush1.msra.mxu0 0.0
        %1203 = vmatprep.subr.mxu0 0.0
        %1204 = vmatpush1.msra.mxu0 0.0
        %1205 = vmatprep.subr.mxu0 0.0
        %1206 = vmatpush1.msra.mxu0 0.0
        %1207 = vmatprep.subr.mxu0 0.0
        %1208 = vmatpush1.msra.mxu0 0.0
        %1209 = vmatprep.mubr.f32.mxu0 0.0
        %1210 = vmatmul.mubr.f32.gmra.mrb[0].mxu0 %v1143
        %v1211 = vpop.f32.mrb[0].mxu0
        %v1212 = vadd.f32 %v1139, %v1211
        %v1213 = vpop.f32.mrb[0].mxu0
        %1214 = vdwg.mxu0
        %s1215 = scalar_lea.vmem %s1, 64
        %v1216 = vld [vmem:[%s1215] sm:$0xff]
        %v1217 = vld [vmem:[%s1215 + $0x8] sm:$0xff]
        %v1218 = vld [vmem:[%s1215 + $0x10] sm:$0xff]
        %v1219 = vld [vmem:[%s1215 + $0x18] sm:$0xff]
        %1220 = vmatprep.subr.mxu0 0.0
        %1221 = vmatpush1.msra.mxu0 %v1216
        %1222 = vmatprep.subr.mxu0 0.0
        %1223 = vmatpush1.msra.mxu0 %v1217
        %1224 = vmatprep.subr.mxu0 0.0
        %1225 = vmatpush1.msra.mxu0 %v1218
        %1226 = vmatprep.subr.mxu0 0.0
        %1227 = vmatpush1.msra.mxu0 %v1219
        %1228 = vmatprep.subr.mxu0 0.0
        %1229 = vmatpush1.msra.mxu0 0.0
        %1230 = vmatprep.subr.mxu0 0.0
        %1231 = vmatpush1.msra.mxu0 0.0
        %1232 = vmatprep.subr.mxu0 0.0
        %1233 = vmatpush1.msra.mxu0 0.0
        %1234 = vmatprep.subr.mxu0 0.0
        %1235 = vmatpush1.msra.mxu0 0.0
        %1236 = vmatprep.subr.mxu0 0.0
        %1237 = vmatpush1.msra.mxu0 0.0
        %1238 = vmatprep.subr.mxu0 0.0
        %1239 = vmatpush1.msra.mxu0 0.0
        %1240 = vmatprep.subr.mxu0 0.0
        %1241 = vmatpush1.msra.mxu0 0.0
        %1242 = vmatprep.subr.mxu0 0.0
        %1243 = vmatpush1.msra.mxu0 0.0
        %1244 = vmatprep.subr.mxu0 0.0
        %1245 = vmatpush1.msra.mxu0 0.0
        %1246 = vmatprep.subr.mxu0 0.0
        %1247 = vmatpush1.msra.mxu0 0.0
        %1248 = vmatprep.subr.mxu0 0.0
        %1249 = vmatpush1.msra.mxu0 0.0
        %1250 = vmatprep.subr.mxu0 0.0
        %1251 = vmatpush1.msra.mxu0 0.0
        %1252 = vmatprep.subr.mxu0 0.0
        %1253 = vmatpush1.msra.mxu0 0.0
        %1254 = vmatprep.subr.mxu0 0.0
        %1255 = vmatpush1.msra.mxu0 0.0
        %1256 = vmatprep.subr.mxu0 0.0
        %1257 = vmatpush1.msra.mxu0 0.0
        %1258 = vmatprep.subr.mxu0 0.0
        %1259 = vmatpush1.msra.mxu0 0.0
        %1260 = vmatprep.subr.mxu0 0.0
        %1261 = vmatpush1.msra.mxu0 0.0
        %1262 = vmatprep.subr.mxu0 0.0
        %1263 = vmatpush1.msra.mxu0 0.0
        %1264 = vmatprep.subr.mxu0 0.0
        %1265 = vmatpush1.msra.mxu0 0.0
        %1266 = vmatprep.subr.mxu0 0.0
        %1267 = vmatpush1.msra.mxu0 0.0
        %1268 = vmatprep.subr.mxu0 0.0
        %1269 = vmatpush1.msra.mxu0 0.0
        %1270 = vmatprep.subr.mxu0 0.0
        %1271 = vmatpush1.msra.mxu0 0.0
        %1272 = vmatprep.subr.mxu0 0.0
        %1273 = vmatpush1.msra.mxu0 0.0
        %1274 = vmatprep.subr.mxu0 0.0
        %1275 = vmatpush1.msra.mxu0 0.0
        %1276 = vmatprep.subr.mxu0 0.0
        %1277 = vmatpush1.msra.mxu0 0.0
        %1278 = vmatprep.subr.mxu0 0.0
        %1279 = vmatpush1.msra.mxu0 0.0
        %1280 = vmatprep.subr.mxu0 0.0
        %1281 = vmatpush1.msra.mxu0 0.0
        %1282 = vmatprep.subr.mxu0 0.0
        %1283 = vmatpush1.msra.mxu0 0.0
        %1284 = vmatprep.mubr.f32.mxu0 0.0
        %1285 = vmatmul.mubr.f32.gmra.mrb[0].mxu0 %v292
        %v1286 = vpop.f32.mrb[0].mxu0
        %v1287 = vadd.f32 0.0, %v1286
        %v1288 = vpop.f32.mrb[0].mxu0
        %1289 = vdwg.mxu0
        %v1290 = vmul.f32 %v1287, 0.25
        %s1291 = scalar_lea.vmem %s2, 64
        %v1292 = vld [vmem:[%s1291] sm:$0xff]
        %v1293 = vld [vmem:[%s1291 + $0x8] sm:$0xff]
        %v1294 = vld [vmem:[%s1291 + $0x10] sm:$0xff]
        %v1295 = vld [vmem:[%s1291 + $0x18] sm:$0xff]
        %1296 = vmatprep.subr.mxu0 0.0
        %1297 = vmatpush1.msra.mxu0 %v1292
        %1298 = vmatprep.subr.mxu0 0.0
        %1299 = vmatpush1.msra.mxu0 %v1293
        %1300 = vmatprep.subr.mxu0 0.0
        %1301 = vmatpush1.msra.mxu0 %v1294
        %1302 = vmatprep.subr.mxu0 0.0
        %1303 = vmatpush1.msra.mxu0 %v1295
        %1304 = vmatprep.subr.mxu0 0.0
        %1305 = vmatpush1.msra.mxu0 0.0
        %1306 = vmatprep.subr.mxu0 0.0
        %1307 = vmatpush1.msra.mxu0 0.0
        %1308 = vmatprep.subr.mxu0 0.0
        %1309 = vmatpush1.msra.mxu0 0.0
        %1310 = vmatprep.subr.mxu0 0.0
        %1311 = vmatpush1.msra.mxu0 0.0
        %1312 = vmatprep.subr.mxu0 0.0
        %1313 = vmatpush1.msra.mxu0 0.0
        %1314 = vmatprep.subr.mxu0 0.0
        %1315 = vmatpush1.msra.mxu0 0.0
        %1316 = vmatprep.subr.mxu0 0.0
        %1317 = vmatpush1.msra.mxu0 0.0
        %1318 = vmatprep.subr.mxu0 0.0
        %1319 = vmatpush1.msra.mxu0 0.0
        %1320 = vmatprep.subr.mxu0 0.0
        %1321 = vmatpush1.msra.mxu0 0.0
        %1322 = vmatprep.subr.mxu0 0.0
        %1323 = vmatpush1.msra.mxu0 0.0
        %1324 = vmatprep.subr.mxu0 0.0
        %1325 = vmatpush1.msra.mxu0 0.0
        %1326 = vmatprep.subr.mxu0 0.0
        %1327 = vmatpush1.msra.mxu0 0.0
        %1328 = vmatprep.subr.mxu0 0.0
        %1329 = vmatpush1.msra.mxu0 0.0
        %1330 = vmatprep.subr.mxu0 0.0
        %1331 = vmatpush1.msra.mxu0 0.0
        %1332 = vmatprep.subr.mxu0 0.0
        %1333 = vmatpush1.msra.mxu0 0.0
        %1334 = vmatprep.subr.mxu0 0.0
        %1335 = vmatpush1.msra.mxu0 0.0
        %1336 = vmatprep.subr.mxu0 0.0
        %1337 = vmatpush1.msra.mxu0 0.0
        %1338 = vmatprep.subr.mxu0 0.0
        %1339 = vmatpush1.msra.mxu0 0.0
        %1340 = vmatprep.subr.mxu0 0.0
        %1341 = vmatpush1.msra.mxu0 0.0
        %1342 = vmatprep.subr.mxu0 0.0
        %1343 = vmatpush1.msra.mxu0 0.0
        %1344 = vmatprep.subr.mxu0 0.0
        %1345 = vmatpush1.msra.mxu0 0.0
        %1346 = vmatprep.subr.mxu0 0.0
        %1347 = vmatpush1.msra.mxu0 0.0
        %1348 = vmatprep.subr.mxu0 0.0
        %1349 = vmatpush1.msra.mxu0 0.0
        %1350 = vmatprep.subr.mxu0 0.0
        %1351 = vmatpush1.msra.mxu0 0.0
        %1352 = vmatprep.subr.mxu0 0.0
        %1353 = vmatpush1.msra.mxu0 0.0
        %1354 = vmatprep.subr.mxu0 0.0
        %1355 = vmatpush1.msra.mxu0 0.0
        %1356 = vmatprep.subr.mxu0 0.0
        %1357 = vmatpush1.msra.mxu0 0.0
        %1358 = vmatprep.subr.mxu0 0.0
        %1359 = vmatpush1.msra.mxu0 0.0
        %1360 = vmatprep.mubr.f32.mxu0 0.0
        %1361 = vmatmul.mubr.f32.gmra.mrb[0].mxu0 %v292
        %v1362 = vpop.f32.mrb[0].mxu0
        %v1363 = vadd.f32 0.0, %v1362
        %v1364 = vpop.f32.mrb[0].mxu0
        %1365 = vdwg.mxu0
        %s1366 = scalar_lea.vmem %s3, 64
        %v1367 = vld [vmem:[%s1366] sm:$0xff]
        %v1368 = vld [vmem:[%s1366 + $0x8] sm:$0xff]
        %v1369 = vld [vmem:[%s1366 + $0x10] sm:$0xff]
        %v1370 = vld [vmem:[%s1366 + $0x18] sm:$0xff]
        %1371 = vmatprep.subr.mxu0 0.0
        %1372 = vmatpush1.msra.mxu0 %v1367
        %1373 = vmatprep.subr.mxu0 0.0
        %1374 = vmatpush1.msra.mxu0 %v1368
        %1375 = vmatprep.subr.mxu0 0.0
        %1376 = vmatpush1.msra.mxu0 %v1369
        %1377 = vmatprep.subr.mxu0 0.0
        %1378 = vmatpush1.msra.mxu0 %v1370
        %1379 = vmatprep.subr.mxu0 0.0
        %1380 = vmatpush1.msra.mxu0 0.0
        %1381 = vmatprep.subr.mxu0 0.0
        %1382 = vmatpush1.msra.mxu0 0.0
        %1383 = vmatprep.subr.mxu0 0.0
        %1384 = vmatpush1.msra.mxu0 0.0
        %1385 = vmatprep.subr.mxu0 0.0
        %1386 = vmatpush1.msra.mxu0 0.0
        %1387 = vmatprep.subr.mxu0 0.0
        %1388 = vmatpush1.msra.mxu0 0.0
        %1389 = vmatprep.subr.mxu0 0.0
        %1390 = vmatpush1.msra.mxu0 0.0
        %1391 = vmatprep.subr.mxu0 0.0
        %1392 = vmatpush1.msra.mxu0 0.0
        %1393 = vmatprep.subr.mxu0 0.0
        %1394 = vmatpush1.msra.mxu0 0.0
        %1395 = vmatprep.subr.mxu0 0.0
        %1396 = vmatpush1.msra.mxu0 0.0
        %1397 = vmatprep.subr.mxu0 0.0
        %1398 = vmatpush1.msra.mxu0 0.0
        %1399 = vmatprep.subr.mxu0 0.0
        %1400 = vmatpush1.msra.mxu0 0.0
        %1401 = vmatprep.subr.mxu0 0.0
        %1402 = vmatpush1.msra.mxu0 0.0
        %1403 = vmatprep.subr.mxu0 0.0
        %1404 = vmatpush1.msra.mxu0 0.0
        %1405 = vmatprep.subr.mxu0 0.0
        %1406 = vmatpush1.msra.mxu0 0.0
        %1407 = vmatprep.subr.mxu0 0.0
        %1408 = vmatpush1.msra.mxu0 0.0
        %1409 = vmatprep.subr.mxu0 0.0
        %1410 = vmatpush1.msra.mxu0 0.0
        %1411 = vmatprep.subr.mxu0 0.0
        %1412 = vmatpush1.msra.mxu0 0.0
        %1413 = vmatprep.subr.mxu0 0.0
        %1414 = vmatpush1.msra.mxu0 0.0
        %1415 = vmatprep.subr.mxu0 0.0
        %1416 = vmatpush1.msra.mxu0 0.0
        %1417 = vmatprep.subr.mxu0 0.0
        %1418 = vmatpush1.msra.mxu0 0.0
        %1419 = vmatprep.subr.mxu0 0.0
        %1420 = vmatpush1.msra.mxu0 0.0
        %1421 = vmatprep.subr.mxu0 0.0
        %1422 = vmatpush1.msra.mxu0 0.0
        %1423 = vmatprep.subr.mxu0 0.0
        %1424 = vmatpush1.msra.mxu0 0.0
        %1425 = vmatprep.subr.mxu0 0.0
        %1426 = vmatpush1.msra.mxu0 0.0
        %1427 = vmatprep.subr.mxu0 0.0
        %1428 = vmatpush1.msra.mxu0 0.0
        %1429 = vmatprep.subr.mxu0 0.0
        %1430 = vmatpush1.msra.mxu0 0.0
        %1431 = vmatprep.subr.mxu0 0.0
        %1432 = vmatpush1.msra.mxu0 0.0
        %1433 = vmatprep.subr.mxu0 0.0
        %1434 = vmatpush1.msra.mxu0 0.0
        %1435 = vmatprep.mubr.f32.mxu0 0.0
        %1436 = vmatmul.mubr.f32.gmra.mrb[0].mxu0 %v292
        %v1437 = vpop.f32.mrb[0].mxu0
        %v1438 = vadd.f32 0.0, %v1437
        %v1439 = vpop.f32.mrb[0].mxu0
        %1440 = vdwg.mxu0
        %v1442 = vsel %vm513, %v1290, 0
        %v1445 = vsel %vm513, %v1363, 0
        %1447 = vmatprep.subr.mxu0 0.0
        %1448 = vmatpush1.xpose.msra.mxu0 %v1445
        %1449 = vmatprep.subr.mxu0 0.0
        %1450 = vmatpush1.xpose.msra.mxu0 0.0
        %1451 = vmatprep.subr.mxu0 0.0
        %1452 = vmatpush1.xpose.msra.mxu0 0.0
        %1453 = vmatprep.subr.mxu0 0.0
        %1454 = vmatpush1.xpose.msra.mxu0 0.0
        %1455 = vmatprep.subr.mxu0 0.0
        %1456 = vmatpush1.xpose.msra.mxu0 0.0
        %1457 = vmatprep.subr.mxu0 0.0
        %1458 = vmatpush1.xpose.msra.mxu0 0.0
        %1459 = vmatprep.subr.mxu0 0.0
        %1460 = vmatpush1.xpose.msra.mxu0 0.0
        %1461 = vmatprep.subr.mxu0 0.0
        %1462 = vmatpush1.xpose.msra.mxu0 0.0
        %1463 = vmatprep.subr.mxu0 0.0
        %1464 = vmatpush1.xpose.msra.mxu0 0.0
        %1465 = vmatprep.subr.mxu0 0.0
        %1466 = vmatpush1.xpose.msra.mxu0 0.0
        %1467 = vmatprep.subr.mxu0 0.0
        %1468 = vmatpush1.xpose.msra.mxu0 0.0
        %1469 = vmatprep.subr.mxu0 0.0
        %1470 = vmatpush1.xpose.msra.mxu0 0.0
        %1471 = vmatprep.subr.mxu0 0.0
        %1472 = vmatpush1.xpose.msra.mxu0 0.0
        %1473 = vmatprep.subr.mxu0 0.0
        %1474 = vmatpush1.xpose.msra.mxu0 0.0
        %1475 = vmatprep.subr.mxu0 0.0
        %1476 = vmatpush1.xpose.msra.mxu0 0.0
        %1477 = vmatprep.subr.mxu0 0.0
        %1478 = vmatpush1.xpose.msra.mxu0 0.0
        %1479 = vmatprep.subr.mxu0 0.0
        %1480 = vmatpush1.xpose.msra.mxu0 0.0
        %1481 = vmatprep.subr.mxu0 0.0
        %1482 = vmatpush1.xpose.msra.mxu0 0.0
        %1483 = vmatprep.subr.mxu0 0.0
        %1484 = vmatpush1.xpose.msra.mxu0 0.0
        %1485 = vmatprep.subr.mxu0 0.0
        %1486 = vmatpush1.xpose.msra.mxu0 0.0
        %1487 = vmatprep.subr.mxu0 0.0
        %1488 = vmatpush1.xpose.msra.mxu0 0.0
        %1489 = vmatprep.subr.mxu0 0.0
        %1490 = vmatpush1.xpose.msra.mxu0 0.0
        %1491 = vmatprep.subr.mxu0 0.0
        %1492 = vmatpush1.xpose.msra.mxu0 0.0
        %1493 = vmatprep.subr.mxu0 0.0
        %1494 = vmatpush1.xpose.msra.mxu0 0.0
        %1495 = vmatprep.subr.mxu0 0.0
        %1496 = vmatpush1.xpose.msra.mxu0 0.0
        %1497 = vmatprep.subr.mxu0 0.0
        %1498 = vmatpush1.xpose.msra.mxu0 0.0
        %1499 = vmatprep.subr.mxu0 0.0
        %1500 = vmatpush1.xpose.msra.mxu0 0.0
        %1501 = vmatprep.subr.mxu0 0.0
        %1502 = vmatpush1.xpose.msra.mxu0 0.0
        %1503 = vmatprep.subr.mxu0 0.0
        %1504 = vmatpush1.xpose.msra.mxu0 0.0
        %1505 = vmatprep.subr.mxu0 0.0
        %1506 = vmatpush1.xpose.msra.mxu0 0.0
        %1507 = vmatprep.subr.mxu0 0.0
        %1508 = vmatpush1.xpose.msra.mxu0 0.0
        %1509 = vmatprep.subr.mxu0 0.0
        %1510 = vmatpush1.xpose.msra.mxu0 0.0
        %1511 = vmatprep.mubr.f32.mxu0 0.0
        %1512 = vmatmul.mubr.f32.gmra.mrb[0].mxu0 %v1442
        %v1513 = vpop.f32.mrb[0].mxu0
        %v1514 = vadd.f32 0.0, %v1513
        %v1515 = vpop.f32.mrb[0].mxu0
        %1516 = vdwg.mxu0
        %v1517 = vsel %vm590, %v1514, -inf
        %1518 = vmax.xlane.f32.xlu0 %v1517
        %v1519 = vpop.xlane.xlu0 %1518
        %v1520 = vsub.f32 %v1514, %v1519
        %v1521 = vmul.f32 %v1520, 1.442695
        %v1522 = vpow.pop %v1521
        %v1523 = vsel %vm590, %v1522, 0.0
        %1524 = vadd.xlane.f32.xlu0 %v1523
        %v1525 = vpop.xlane.xlu0 %1524
        %v1526 = vrcp.pop %v1525
        %v1527 = vmul.f32 %v1522, %v1526
        %s1528 = scalar_lea.vmem %s280, 16 [#allocation4]
        %1529 = vst.msk [vmem:[%s1528] sm:$0xff] %vm590, %v1527
        %v1531 = vsel %vm590, %v1527, 0
        %1533 = vmatprep.subr.mxu0 0.0
        %1534 = vmatpush1.msra.mxu0 %v1438
        %1535 = vmatprep.subr.mxu0 0.0
        %1536 = vmatpush1.msra.mxu0 0.0
        %1537 = vmatprep.subr.mxu0 0.0
        %1538 = vmatpush1.msra.mxu0 0.0
        %1539 = vmatprep.subr.mxu0 0.0
        %1540 = vmatpush1.msra.mxu0 0.0
        %1541 = vmatprep.subr.mxu0 0.0
        %1542 = vmatpush1.msra.mxu0 0.0
        %1543 = vmatprep.subr.mxu0 0.0
        %1544 = vmatpush1.msra.mxu0 0.0
        %1545 = vmatprep.subr.mxu0 0.0
        %1546 = vmatpush1.msra.mxu0 0.0
        %1547 = vmatprep.subr.mxu0 0.0
        %1548 = vmatpush1.msra.mxu0 0.0
        %1549 = vmatprep.subr.mxu0 0.0
        %1550 = vmatpush1.msra.mxu0 0.0
        %1551 = vmatprep.subr.mxu0 0.0
        %1552 = vmatpush1.msra.mxu0 0.0
        %1553 = vmatprep.subr.mxu0 0.0
        %1554 = vmatpush1.msra.mxu0 0.0
        %1555 = vmatprep.subr.mxu0 0.0
        %1556 = vmatpush1.msra.mxu0 0.0
        %1557 = vmatprep.subr.mxu0 0.0
        %1558 = vmatpush1.msra.mxu0 0.0
        %1559 = vmatprep.subr.mxu0 0.0
        %1560 = vmatpush1.msra.mxu0 0.0
        %1561 = vmatprep.subr.mxu0 0.0
        %1562 = vmatpush1.msra.mxu0 0.0
        %1563 = vmatprep.subr.mxu0 0.0
        %1564 = vmatpush1.msra.mxu0 0.0
        %1565 = vmatprep.subr.mxu0 0.0
        %1566 = vmatpush1.msra.mxu0 0.0
        %1567 = vmatprep.subr.mxu0 0.0
        %1568 = vmatpush1.msra.mxu0 0.0
        %1569 = vmatprep.subr.mxu0 0.0
        %1570 = vmatpush1.msra.mxu0 0.0
        %1571 = vmatprep.subr.mxu0 0.0
        %1572 = vmatpush1.msra.mxu0 0.0
        %1573 = vmatprep.subr.mxu0 0.0
        %1574 = vmatpush1.msra.mxu0 0.0
        %1575 = vmatprep.subr.mxu0 0.0
        %1576 = vmatpush1.msra.mxu0 0.0
        %1577 = vmatprep.subr.mxu0 0.0
        %1578 = vmatpush1.msra.mxu0 0.0
        %1579 = vmatprep.subr.mxu0 0.0
        %1580 = vmatpush1.msra.mxu0 0.0
        %1581 = vmatprep.subr.mxu0 0.0
        %1582 = vmatpush1.msra.mxu0 0.0
        %1583 = vmatprep.subr.mxu0 0.0
        %1584 = vmatpush1.msra.mxu0 0.0
        %1585 = vmatprep.subr.mxu0 0.0
        %1586 = vmatpush1.msra.mxu0 0.0
        %1587 = vmatprep.subr.mxu0 0.0
        %1588 = vmatpush1.msra.mxu0 0.0
        %1589 = vmatprep.subr.mxu0 0.0
        %1590 = vmatpush1.msra.mxu0 0.0
        %1591 = vmatprep.subr.mxu0 0.0
        %1592 = vmatpush1.msra.mxu0 0.0
        %1593 = vmatprep.subr.mxu0 0.0
        %1594 = vmatpush1.msra.mxu0 0.0
        %1595 = vmatprep.subr.mxu0 0.0
        %1596 = vmatpush1.msra.mxu0 0.0
        %1597 = vmatprep.mubr.f32.mxu0 0.0
        %1598 = vmatmul.mubr.f32.gmra.mrb[0].mxu0 %v1531
        %v1599 = vpop.f32.mrb[0].mxu0
        %v1600 = vadd.f32 0.0, %v1599
        %v1601 = vpop.f32.mrb[0].mxu0
        %1602 = vdwg.mxu0
        %s1603 = scalar_lea.vmem %s4, 32
        %v1604 = vld [vmem:[%s1603] sm:$0xff]
        %v1605 = vld [vmem:[%s1603 + $0x8] sm:$0xff]
        %v1607 = vsel %vm513, %v1600, 0
        %1609 = vmatprep.subr.mxu0 0.0
        %1610 = vmatpush1.msra.mxu0 %v1604
        %1611 = vmatprep.subr.mxu0 0.0
        %1612 = vmatpush1.msra.mxu0 %v1605
        %1613 = vmatprep.subr.mxu0 0.0
        %1614 = vmatpush1.msra.mxu0 0.0
        %1615 = vmatprep.subr.mxu0 0.0
        %1616 = vmatpush1.msra.mxu0 0.0
        %1617 = vmatprep.subr.mxu0 0.0
        %1618 = vmatpush1.msra.mxu0 0.0
        %1619 = vmatprep.subr.mxu0 0.0
        %1620 = vmatpush1.msra.mxu0 0.0
        %1621 = vmatprep.subr.mxu0 0.0
        %1622 = vmatpush1.msra.mxu0 0.0
        %1623 = vmatprep.subr.mxu0 0.0
        %1624 = vmatpush1.msra.mxu0 0.0
        %1625 = vmatprep.subr.mxu0 0.0
        %1626 = vmatpush1.msra.mxu0 0.0
        %1627 = vmatprep.subr.mxu0 0.0
        %1628 = vmatpush1.msra.mxu0 0.0
        %1629 = vmatprep.subr.mxu0 0.0
        %1630 = vmatpush1.msra.mxu0 0.0
        %1631 = vmatprep.subr.mxu0 0.0
        %1632 = vmatpush1.msra.mxu0 0.0
        %1633 = vmatprep.subr.mxu0 0.0
        %1634 = vmatpush1.msra.mxu0 0.0
        %1635 = vmatprep.subr.mxu0 0.0
        %1636 = vmatpush1.msra.mxu0 0.0
        %1637 = vmatprep.subr.mxu0 0.0
        %1638 = vmatpush1.msra.mxu0 0.0
        %1639 = vmatprep.subr.mxu0 0.0
        %1640 = vmatpush1.msra.mxu0 0.0
        %1641 = vmatprep.subr.mxu0 0.0
        %1642 = vmatpush1.msra.mxu0 0.0
        %1643 = vmatprep.subr.mxu0 0.0
        %1644 = vmatpush1.msra.mxu0 0.0
        %1645 = vmatprep.subr.mxu0 0.0
        %1646 = vmatpush1.msra.mxu0 0.0
        %1647 = vmatprep.subr.mxu0 0.0
        %1648 = vmatpush1.msra.mxu0 0.0
        %1649 = vmatprep.subr.mxu0 0.0
        %1650 = vmatpush1.msra.mxu0 0.0
        %1651 = vmatprep.subr.mxu0 0.0
        %1652 = vmatpush1.msra.mxu0 0.0
        %1653 = vmatprep.subr.mxu0 0.0
        %1654 = vmatpush1.msra.mxu0 0.0
        %1655 = vmatprep.subr.mxu0 0.0
        %1656 = vmatpush1.msra.mxu0 0.0
        %1657 = vmatprep.subr.mxu0 0.0
        %1658 = vmatpush1.msra.mxu0 0.0
        %1659 = vmatprep.subr.mxu0 0.0
        %1660 = vmatpush1.msra.mxu0 0.0
        %1661 = vmatprep.subr.mxu0 0.0
        %1662 = vmatpush1.msra.mxu0 0.0
        %1663 = vmatprep.subr.mxu0 0.0
        %1664 = vmatpush1.msra.mxu0 0.0
        %1665 = vmatprep.subr.mxu0 0.0
        %1666 = vmatpush1.msra.mxu0 0.0
        %1667 = vmatprep.subr.mxu0 0.0
        %1668 = vmatpush1.msra.mxu0 0.0
        %1669 = vmatprep.subr.mxu0 0.0
        %1670 = vmatpush1.msra.mxu0 0.0
        %1671 = vmatprep.subr.mxu0 0.0
        %1672 = vmatpush1.msra.mxu0 0.0
        %1673 = vmatprep.mubr.f32.mxu0 0.0
        %1674 = vmatmul.mubr.f32.gmra.mrb[0].mxu0 %v1607
        %v1675 = vpop.f32.mrb[0].mxu0
        %v1676 = vadd.f32 0.0, %v1675
        %v1677 = vpop.f32.mrb[0].mxu0
        %1678 = vdwg.mxu0
        %v1679 = vadd.f32 %v1212, %v1676
        %s1680 = scalar_lea.vmem %s1, 96
        %v1681 = vld [vmem:[%s1680] sm:$0xff]
        %v1682 = vld [vmem:[%s1680 + $0x8] sm:$0xff]
        %v1683 = vld [vmem:[%s1680 + $0x10] sm:$0xff]
        %v1684 = vld [vmem:[%s1680 + $0x18] sm:$0xff]
        %1685 = vmatprep.subr.mxu0 0.0
        %1686 = vmatpush1.msra.mxu0 %v1681
        %1687 = vmatprep.subr.mxu0 0.0
        %1688 = vmatpush1.msra.mxu0 %v1682
        %1689 = vmatprep.subr.mxu0 0.0
        %1690 = vmatpush1.msra.mxu0 %v1683
        %1691 = vmatprep.subr.mxu0 0.0
        %1692 = vmatpush1.msra.mxu0 %v1684
        %1693 = vmatprep.subr.mxu0 0.0
        %1694 = vmatpush1.msra.mxu0 0.0
        %1695 = vmatprep.subr.mxu0 0.0
        %1696 = vmatpush1.msra.mxu0 0.0
        %1697 = vmatprep.subr.mxu0 0.0
        %1698 = vmatpush1.msra.mxu0 0.0
        %1699 = vmatprep.subr.mxu0 0.0
        %1700 = vmatpush1.msra.mxu0 0.0
        %1701 = vmatprep.subr.mxu0 0.0
        %1702 = vmatpush1.msra.mxu0 0.0
        %1703 = vmatprep.subr.mxu0 0.0
        %1704 = vmatpush1.msra.mxu0 0.0
        %1705 = vmatprep.subr.mxu0 0.0
        %1706 = vmatpush1.msra.mxu0 0.0
        %1707 = vmatprep.subr.mxu0 0.0
        %1708 = vmatpush1.msra.mxu0 0.0
        %1709 = vmatprep.subr.mxu0 0.0
        %1710 = vmatpush1.msra.mxu0 0.0
        %1711 = vmatprep.subr.mxu0 0.0
        %1712 = vmatpush1.msra.mxu0 0.0
        %1713 = vmatprep.subr.mxu0 0.0
        %1714 = vmatpush1.msra.mxu0 0.0
        %1715 = vmatprep.subr.mxu0 0.0
        %1716 = vmatpush1.msra.mxu0 0.0
        %1717 = vmatprep.subr.mxu0 0.0
        %1718 = vmatpush1.msra.mxu0 0.0
        %1719 = vmatprep.subr.mxu0 0.0
        %1720 = vmatpush1.msra.mxu0 0.0
        %1721 = vmatprep.subr.mxu0 0.0
        %1722 = vmatpush1.msra.mxu0 0.0
        %1723 = vmatprep.subr.mxu0 0.0
        %1724 = vmatpush1.msra.mxu0 0.0
        %1725 = vmatprep.subr.mxu0 0.0
        %1726 = vmatpush1.msra.mxu0 0.0
        %1727 = vmatprep.subr.mxu0 0.0
        %1728 = vmatpush1.msra.mxu0 0.0
        %1729 = vmatprep.subr.mxu0 0.0
        %1730 = vmatpush1.msra.mxu0 0.0
        %1731 = vmatprep.subr.mxu0 0.0
        %1732 = vmatpush1.msra.mxu0 0.0
        %1733 = vmatprep.subr.mxu0 0.0
        %1734 = vmatpush1.msra.mxu0 0.0
        %1735 = vmatprep.subr.mxu0 0.0
        %1736 = vmatpush1.msra.mxu0 0.0
        %1737 = vmatprep.subr.mxu0 0.0
        %1738 = vmatpush1.msra.mxu0 0.0
        %1739 = vmatprep.subr.mxu0 0.0
        %1740 = vmatpush1.msra.mxu0 0.0
        %1741 = vmatprep.subr.mxu0 0.0
        %1742 = vmatpush1.msra.mxu0 0.0
        %1743 = vmatprep.subr.mxu0 0.0
        %1744 = vmatpush1.msra.mxu0 0.0
        %1745 = vmatprep.subr.mxu0 0.0
        %1746 = vmatpush1.msra.mxu0 0.0
        %1747 = vmatprep.subr.mxu0 0.0
        %1748 = vmatpush1.msra.mxu0 0.0
        %1749 = vmatprep.mubr.f32.mxu0 0.0
        %1750 = vmatmul.mubr.f32.gmra.mrb[0].mxu0 %v292
        %v1751 = vpop.f32.mrb[0].mxu0
        %v1752 = vadd.f32 0.0, %v1751
        %v1753 = vpop.f32.mrb[0].mxu0
        %1754 = vdwg.mxu0
        %v1755 = vmul.f32 %v1752, 0.25
        %s1756 = scalar_lea.vmem %s2, 96
        %v1757 = vld [vmem:[%s1756] sm:$0xff]
        %v1758 = vld [vmem:[%s1756 + $0x8] sm:$0xff]
        %v1759 = vld [vmem:[%s1756 + $0x10] sm:$0xff]
        %v1760 = vld [vmem:[%s1756 + $0x18] sm:$0xff]
        %1761 = vmatprep.subr.mxu0 0.0
        %1762 = vmatpush1.msra.mxu0 %v1757
        %1763 = vmatprep.subr.mxu0 0.0
        %1764 = vmatpush1.msra.mxu0 %v1758
        %1765 = vmatprep.subr.mxu0 0.0
        %1766 = vmatpush1.msra.mxu0 %v1759
        %1767 = vmatprep.subr.mxu0 0.0
        %1768 = vmatpush1.msra.mxu0 %v1760
        %1769 = vmatprep.subr.mxu0 0.0
        %1770 = vmatpush1.msra.mxu0 0.0
        %1771 = vmatprep.subr.mxu0 0.0
        %1772 = vmatpush1.msra.mxu0 0.0
        %1773 = vmatprep.subr.mxu0 0.0
        %1774 = vmatpush1.msra.mxu0 0.0
        %1775 = vmatprep.subr.mxu0 0.0
        %1776 = vmatpush1.msra.mxu0 0.0
        %1777 = vmatprep.subr.mxu0 0.0
        %1778 = vmatpush1.msra.mxu0 0.0
        %1779 = vmatprep.subr.mxu0 0.0
        %1780 = vmatpush1.msra.mxu0 0.0
        %1781 = vmatprep.subr.mxu0 0.0
        %1782 = vmatpush1.msra.mxu0 0.0
        %1783 = vmatprep.subr.mxu0 0.0
        %1784 = vmatpush1.msra.mxu0 0.0
        %1785 = vmatprep.subr.mxu0 0.0
        %1786 = vmatpush1.msra.mxu0 0.0
        %1787 = vmatprep.subr.mxu0 0.0
        %1788 = vmatpush1.msra.mxu0 0.0
        %1789 = vmatprep.subr.mxu0 0.0
        %1790 = vmatpush1.msra.mxu0 0.0
        %1791 = vmatprep.subr.mxu0 0.0
        %1792 = vmatpush1.msra.mxu0 0.0
        %1793 = vmatprep.subr.mxu0 0.0
        %1794 = vmatpush1.msra.mxu0 0.0
        %1795 = vmatprep.subr.mxu0 0.0
        %1796 = vmatpush1.msra.mxu0 0.0
        %1797 = vmatprep.subr.mxu0 0.0
        %1798 = vmatpush1.msra.mxu0 0.0
        %1799 = vmatprep.subr.mxu0 0.0
        %1800 = vmatpush1.msra.mxu0 0.0
        %1801 = vmatprep.subr.mxu0 0.0
        %1802 = vmatpush1.msra.mxu0 0.0
        %1803 = vmatprep.subr.mxu0 0.0
        %1804 = vmatpush1.msra.mxu0 0.0
        %1805 = vmatprep.subr.mxu0 0.0
        %1806 = vmatpush1.msra.mxu0 0.0
        %1807 = vmatprep.subr.mxu0 0.0
        %1808 = vmatpush1.msra.mxu0 0.0
        %1809 = vmatprep.subr.mxu0 0.0
        %1810 = vmatpush1.msra.mxu0 0.0
        %1811 = vmatprep.subr.mxu0 0.0
        %1812 = vmatpush1.msra.mxu0 0.0
        %1813 = vmatprep.subr.mxu0 0.0
        %1814 = vmatpush1.msra.mxu0 0.0
        %1815 = vmatprep.subr.mxu0 0.0
        %1816 = vmatpush1.msra.mxu0 0.0
        %1817 = vmatprep.subr.mxu0 0.0
        %1818 = vmatpush1.msra.mxu0 0.0
        %1819 = vmatprep.subr.mxu0 0.0
        %1820 = vmatpush1.msra.mxu0 0.0
        %1821 = vmatprep.subr.mxu0 0.0
        %1822 = vmatpush1.msra.mxu0 0.0
        %1823 = vmatprep.subr.mxu0 0.0
        %1824 = vmatpush1.msra.mxu0 0.0
        %1825 = vmatprep.mubr.f32.mxu0 0.0
        %1826 = vmatmul.mubr.f32.gmra.mrb[0].mxu0 %v292
        %v1827 = vpop.f32.mrb[0].mxu0
        %v1828 = vadd.f32 0.0, %v1827
        %v1829 = vpop.f32.mrb[0].mxu0
        %1830 = vdwg.mxu0
        %s1831 = scalar_lea.vmem %s3, 96
        %v1832 = vld [vmem:[%s1831] sm:$0xff]
        %v1833 = vld [vmem:[%s1831 + $0x8] sm:$0xff]
        %v1834 = vld [vmem:[%s1831 + $0x10] sm:$0xff]
        %v1835 = vld [vmem:[%s1831 + $0x18] sm:$0xff]
        %1836 = vmatprep.subr.mxu0 0.0
        %1837 = vmatpush1.msra.mxu0 %v1832
        %1838 = vmatprep.subr.mxu0 0.0
        %1839 = vmatpush1.msra.mxu0 %v1833
        %1840 = vmatprep.subr.mxu0 0.0
        %1841 = vmatpush1.msra.mxu0 %v1834
        %1842 = vmatprep.subr.mxu0 0.0
        %1843 = vmatpush1.msra.mxu0 %v1835
        %1844 = vmatprep.subr.mxu0 0.0
        %1845 = vmatpush1.msra.mxu0 0.0
        %1846 = vmatprep.subr.mxu0 0.0
        %1847 = vmatpush1.msra.mxu0 0.0
        %1848 = vmatprep.subr.mxu0 0.0
        %1849 = vmatpush1.msra.mxu0 0.0
        %1850 = vmatprep.subr.mxu0 0.0
        %1851 = vmatpush1.msra.mxu0 0.0
        %1852 = vmatprep.subr.mxu0 0.0
        %1853 = vmatpush1.msra.mxu0 0.0
        %1854 = vmatprep.subr.mxu0 0.0
        %1855 = vmatpush1.msra.mxu0 0.0
        %1856 = vmatprep.subr.mxu0 0.0
        %1857 = vmatpush1.msra.mxu0 0.0
        %1858 = vmatprep.subr.mxu0 0.0
        %1859 = vmatpush1.msra.mxu0 0.0
        %1860 = vmatprep.subr.mxu0 0.0
        %1861 = vmatpush1.msra.mxu0 0.0
        %1862 = vmatprep.subr.mxu0 0.0
        %1863 = vmatpush1.msra.mxu0 0.0
        %1864 = vmatprep.subr.mxu0 0.0
        %1865 = vmatpush1.msra.mxu0 0.0
        %1866 = vmatprep.subr.mxu0 0.0
        %1867 = vmatpush1.msra.mxu0 0.0
        %1868 = vmatprep.subr.mxu0 0.0
        %1869 = vmatpush1.msra.mxu0 0.0
        %1870 = vmatprep.subr.mxu0 0.0
        %1871 = vmatpush1.msra.mxu0 0.0
        %1872 = vmatprep.subr.mxu0 0.0
        %1873 = vmatpush1.msra.mxu0 0.0
        %1874 = vmatprep.subr.mxu0 0.0
        %1875 = vmatpush1.msra.mxu0 0.0
        %1876 = vmatprep.subr.mxu0 0.0
        %1877 = vmatpush1.msra.mxu0 0.0
        %1878 = vmatprep.subr.mxu0 0.0
        %1879 = vmatpush1.msra.mxu0 0.0
        %1880 = vmatprep.subr.mxu0 0.0
        %1881 = vmatpush1.msra.mxu0 0.0
        %1882 = vmatprep.subr.mxu0 0.0
        %1883 = vmatpush1.msra.mxu0 0.0
        %1884 = vmatprep.subr.mxu0 0.0
        %1885 = vmatpush1.msra.mxu0 0.0
        %1886 = vmatprep.subr.mxu0 0.0
        %1887 = vmatpush1.msra.mxu0 0.0
        %1888 = vmatprep.subr.mxu0 0.0
        %1889 = vmatpush1.msra.mxu0 0.0
        %1890 = vmatprep.subr.mxu0 0.0
        %1891 = vmatpush1.msra.mxu0 0.0
        %1892 = vmatprep.subr.mxu0 0.0
        %1893 = vmatpush1.msra.mxu0 0.0
        %1894 = vmatprep.subr.mxu0 0.0
        %1895 = vmatpush1.msra.mxu0 0.0
        %1896 = vmatprep.subr.mxu0 0.0
        %1897 = vmatpush1.msra.mxu0 0.0
        %1898 = vmatprep.subr.mxu0 0.0
        %1899 = vmatpush1.msra.mxu0 0.0
        %1900 = vmatprep.mubr.f32.mxu0 0.0
        %1901 = vmatmul.mubr.f32.gmra.mrb[0].mxu0 %v292
        %v1902 = vpop.f32.mrb[0].mxu0
        %v1903 = vadd.f32 0.0, %v1902
        %v1904 = vpop.f32.mrb[0].mxu0
        %1905 = vdwg.mxu0
        %v1907 = vsel %vm513, %v1755, 0
        %v1910 = vsel %vm513, %v1828, 0
        %1912 = vmatprep.subr.mxu0 0.0
        %1913 = vmatpush1.xpose.msra.mxu0 %v1910
        %1914 = vmatprep.subr.mxu0 0.0
        %1915 = vmatpush1.xpose.msra.mxu0 0.0
        %1916 = vmatprep.subr.mxu0 0.0
        %1917 = vmatpush1.xpose.msra.mxu0 0.0
        %1918 = vmatprep.subr.mxu0 0.0
        %1919 = vmatpush1.xpose.msra.mxu0 0.0
        %1920 = vmatprep.subr.mxu0 0.0
        %1921 = vmatpush1.xpose.msra.mxu0 0.0
        %1922 = vmatprep.subr.mxu0 0.0
        %1923 = vmatpush1.xpose.msra.mxu0 0.0
        %1924 = vmatprep.subr.mxu0 0.0
        %1925 = vmatpush1.xpose.msra.mxu0 0.0
        %1926 = vmatprep.subr.mxu0 0.0
        %1927 = vmatpush1.xpose.msra.mxu0 0.0
        %1928 = vmatprep.subr.mxu0 0.0
        %1929 = vmatpush1.xpose.msra.mxu0 0.0
        %1930 = vmatprep.subr.mxu0 0.0
        %1931 = vmatpush1.xpose.msra.mxu0 0.0
        %1932 = vmatprep.subr.mxu0 0.0
        %1933 = vmatpush1.xpose.msra.mxu0 0.0
        %1934 = vmatprep.subr.mxu0 0.0
        %1935 = vmatpush1.xpose.msra.mxu0 0.0
        %1936 = vmatprep.subr.mxu0 0.0
        %1937 = vmatpush1.xpose.msra.mxu0 0.0
        %1938 = vmatprep.subr.mxu0 0.0
        %1939 = vmatpush1.xpose.msra.mxu0 0.0
        %1940 = vmatprep.subr.mxu0 0.0
        %1941 = vmatpush1.xpose.msra.mxu0 0.0
        %1942 = vmatprep.subr.mxu0 0.0
        %1943 = vmatpush1.xpose.msra.mxu0 0.0
        %1944 = vmatprep.subr.mxu0 0.0
        %1945 = vmatpush1.xpose.msra.mxu0 0.0
        %1946 = vmatprep.subr.mxu0 0.0
        %1947 = vmatpush1.xpose.msra.mxu0 0.0
        %1948 = vmatprep.subr.mxu0 0.0
        %1949 = vmatpush1.xpose.msra.mxu0 0.0
        %1950 = vmatprep.subr.mxu0 0.0
        %1951 = vmatpush1.xpose.msra.mxu0 0.0
        %1952 = vmatprep.subr.mxu0 0.0
        %1953 = vmatpush1.xpose.msra.mxu0 0.0
        %1954 = vmatprep.subr.mxu0 0.0
        %1955 = vmatpush1.xpose.msra.mxu0 0.0
        %1956 = vmatprep.subr.mxu0 0.0
        %1957 = vmatpush1.xpose.msra.mxu0 0.0
        %1958 = vmatprep.subr.mxu0 0.0
        %1959 = vmatpush1.xpose.msra.mxu0 0.0
        %1960 = vmatprep.subr.mxu0 0.0
        %1961 = vmatpush1.xpose.msra.mxu0 0.0
        %1962 = vmatprep.subr.mxu0 0.0
        %1963 = vmatpush1.xpose.msra.mxu0 0.0
        %1964 = vmatprep.subr.mxu0 0.0
        %1965 = vmatpush1.xpose.msra.mxu0 0.0
        %1966 = vmatprep.subr.mxu0 0.0
        %1967 = vmatpush1.xpose.msra.mxu0 0.0
        %1968 = vmatprep.subr.mxu0 0.0
        %1969 = vmatpush1.xpose.msra.mxu0 0.0
        %1970 = vmatprep.subr.mxu0 0.0
        %1971 = vmatpush1.xpose.msra.mxu0 0.0
        %1972 = vmatprep.subr.mxu0 0.0
        %1973 = vmatpush1.xpose.msra.mxu0 0.0
        %1974 = vmatprep.subr.mxu0 0.0
        %1975 = vmatpush1.xpose.msra.mxu0 0.0
        %1976 = vmatprep.mubr.f32.mxu0 0.0
        %1977 = vmatmul.mubr.f32.gmra.mrb[0].mxu0 %v1907
        %v1978 = vpop.f32.mrb[0].mxu0
        %v1979 = vadd.f32 0.0, %v1978
        %v1980 = vpop.f32.mrb[0].mxu0
        %1981 = vdwg.mxu0
        %v1982 = vsel %vm590, %v1979, -inf
        %1983 = vmax.xlane.f32.xlu0 %v1982
        %v1984 = vpop.xlane.xlu0 %1983
        %v1985 = vsub.f32 %v1979, %v1984
        %v1986 = vmul.f32 %v1985, 1.442695
        %v1987 = vpow.pop %v1986
        %v1988 = vsel %vm590, %v1987, 0.0
        %1989 = vadd.xlane.f32.xlu0 %v1988
        %v1990 = vpop.xlane.xlu0 %1989
        %v1991 = vrcp.pop %v1990
        %v1992 = vmul.f32 %v1987, %v1991
        %s1993 = scalar_lea.vmem %s280, 24 [#allocation4]
        %1994 = vst.msk [vmem:[%s1993] sm:$0xff] %vm590, %v1992
        %v1996 = vsel %vm590, %v1992, 0
        %1998 = vmatprep.subr.mxu0 0.0
        %1999 = vmatpush1.msra.mxu0 %v1903
        %2000 = vmatprep.subr.mxu0 0.0
        %2001 = vmatpush1.msra.mxu0 0.0
        %2002 = vmatprep.subr.mxu0 0.0
        %2003 = vmatpush1.msra.mxu0 0.0
        %2004 = vmatprep.subr.mxu0 0.0
        %2005 = vmatpush1.msra.mxu0 0.0
        %2006 = vmatprep.subr.mxu0 0.0
        %2007 = vmatpush1.msra.mxu0 0.0
        %2008 = vmatprep.subr.mxu0 0.0
        %2009 = vmatpush1.msra.mxu0 0.0
        %2010 = vmatprep.subr.mxu0 0.0
        %2011 = vmatpush1.msra.mxu0 0.0
        %2012 = vmatprep.subr.mxu0 0.0
        %2013 = vmatpush1.msra.mxu0 0.0
        %2014 = vmatprep.subr.mxu0 0.0
        %2015 = vmatpush1.msra.mxu0 0.0
        %2016 = vmatprep.subr.mxu0 0.0
        %2017 = vmatpush1.msra.mxu0 0.0
        %2018 = vmatprep.subr.mxu0 0.0
        %2019 = vmatpush1.msra.mxu0 0.0
        %2020 = vmatprep.subr.mxu0 0.0
        %2021 = vmatpush1.msra.mxu0 0.0
        %2022 = vmatprep.subr.mxu0 0.0
        %2023 = vmatpush1.msra.mxu0 0.0
        %2024 = vmatprep.subr.mxu0 0.0
        %2025 = vmatpush1.msra.mxu0 0.0
        %2026 = vmatprep.subr.mxu0 0.0
        %2027 = vmatpush1.msra.mxu0 0.0
        %2028 = vmatprep.subr.mxu0 0.0
        %2029 = vmatpush1.msra.mxu0 0.0
        %2030 = vmatprep.subr.mxu0 0.0
        %2031 = vmatpush1.msra.mxu0 0.0
        %2032 = vmatprep.subr.mxu0 0.0
        %2033 = vmatpush1.msra.mxu0 0.0
        %2034 = vmatprep.subr.mxu0 0.0
        %2035 = vmatpush1.msra.mxu0 0.0
        %2036 = vmatprep.subr.mxu0 0.0
        %2037 = vmatpush1.msra.mxu0 0.0
        %2038 = vmatprep.subr.mxu0 0.0
        %2039 = vmatpush1.msra.mxu0 0.0
        %2040 = vmatprep.subr.mxu0 0.0
        %2041 = vmatpush1.msra.mxu0 0.0
        %2042 = vmatprep.subr.mxu0 0.0
        %2043 = vmatpush1.msra.mxu0 0.0
        %2044 = vmatprep.subr.mxu0 0.0
        %2045 = vmatpush1.msra.mxu0 0.0
        %2046 = vmatprep.subr.mxu0 0.0
        %2047 = vmatpush1.msra.mxu0 0.0
        %2048 = vmatprep.subr.mxu0 0.0
        %2049 = vmatpush1.msra.mxu0 0.0
        %2050 = vmatprep.subr.mxu0 0.0
        %2051 = vmatpush1.msra.mxu0 0.0
        %2052 = vmatprep.subr.mxu0 0.0
        %2053 = vmatpush1.msra.mxu0 0.0
        %2054 = vmatprep.subr.mxu0 0.0
        %2055 = vmatpush1.msra.mxu0 0.0
        %2056 = vmatprep.subr.mxu0 0.0
        %2057 = vmatpush1.msra.mxu0 0.0
        %2058 = vmatprep.subr.mxu0 0.0
        %2059 = vmatpush1.msra.mxu0 0.0
        %2060 = vmatprep.subr.mxu0 0.0
        %2061 = vmatpush1.msra.mxu0 0.0
        %2062 = vmatprep.mubr.f32.mxu0 0.0
        %2063 = vmatmul.mubr.f32.gmra.mrb[0].mxu0 %v1996
        %v2064 = vpop.f32.mrb[0].mxu0
        %v2065 = vadd.f32 0.0, %v2064
        %v2066 = vpop.f32.mrb[0].mxu0
        %2067 = vdwg.mxu0
        %s2068 = scalar_lea.vmem %s4, 48
        %v2069 = vld [vmem:[%s2068] sm:$0xff]
        %v2070 = vld [vmem:[%s2068 + $0x8] sm:$0xff]
        %v2072 = vsel %vm513, %v2065, 0
        %2074 = vmatprep.subr.mxu0 0.0
        %2075 = vmatpush1.msra.mxu0 %v2069
        %2076 = vmatprep.subr.mxu0 0.0
        %2077 = vmatpush1.msra.mxu0 %v2070
        %2078 = vmatprep.subr.mxu0 0.0
        %2079 = vmatpush1.msra.mxu0 0.0
        %2080 = vmatprep.subr.mxu0 0.0
        %2081 = vmatpush1.msra.mxu0 0.0
        %2082 = vmatprep.subr.mxu0 0.0
        %2083 = vmatpush1.msra.mxu0 0.0
        %2084 = vmatprep.subr.mxu0 0.0
        %2085 = vmatpush1.msra.mxu0 0.0
        %2086 = vmatprep.subr.mxu0 0.0
        %2087 = vmatpush1.msra.mxu0 0.0
        %2088 = vmatprep.subr.mxu0 0.0
        %2089 = vmatpush1.msra.mxu0 0.0
        %2090 = vmatprep.subr.mxu0 0.0
        %2091 = vmatpush1.msra.mxu0 0.0
        %2092 = vmatprep.subr.mxu0 0.0
        %2093 = vmatpush1.msra.mxu0 0.0
        %2094 = vmatprep.subr.mxu0 0.0
        %2095 = vmatpush1.msra.mxu0 0.0
        %2096 = vmatprep.subr.mxu0 0.0
        %2097 = vmatpush1.msra.mxu0 0.0
        %2098 = vmatprep.subr.mxu0 0.0
        %2099 = vmatpush1.msra.mxu0 0.0
        %2100 = vmatprep.subr.mxu0 0.0
        %2101 = vmatpush1.msra.mxu0 0.0
        %2102 = vmatprep.subr.mxu0 0.0
        %2103 = vmatpush1.msra.mxu0 0.0
        %2104 = vmatprep.subr.mxu0 0.0
        %2105 = vmatpush1.msra.mxu0 0.0
        %2106 = vmatprep.subr.mxu0 0.0
        %2107 = vmatpush1.msra.mxu0 0.0
        %2108 = vmatprep.subr.mxu0 0.0
        %2109 = vmatpush1.msra.mxu0 0.0
        %2110 = vmatprep.subr.mxu0 0.0
        %2111 = vmatpush1.msra.mxu0 0.0
        %2112 = vmatprep.subr.mxu0 0.0
        %2113 = vmatpush1.msra.mxu0 0.0
        %2114 = vmatprep.subr.mxu0 0.0
        %2115 = vmatpush1.msra.mxu0 0.0
        %2116 = vmatprep.subr.mxu0 0.0
        %2117 = vmatpush1.msra.mxu0 0.0
        %2118 = vmatprep.subr.mxu0 0.0
        %2119 = vmatpush1.msra.mxu0 0.0
        %2120 = vmatprep.subr.mxu0 0.0
        %2121 = vmatpush1.msra.mxu0 0.0
        %2122 = vmatprep.subr.mxu0 0.0
        %2123 = vmatpush1.msra.mxu0 0.0
        %2124 = vmatprep.subr.mxu0 0.0
        %2125 = vmatpush1.msra.mxu0 0.0
        %2126 = vmatprep.subr.mxu0 0.0
        %2127 = vmatpush1.msra.mxu0 0.0
        %2128 = vmatprep.subr.mxu0 0.0
        %2129 = vmatpush1.msra.mxu0 0.0
        %2130 = vmatprep.subr.mxu0 0.0
        %2131 = vmatpush1.msra.mxu0 0.0
        %2132 = vmatprep.subr.mxu0 0.0
        %2133 = vmatpush1.msra.mxu0 0.0
        %2134 = vmatprep.subr.mxu0 0.0
        %2135 = vmatpush1.msra.mxu0 0.0
        %2136 = vmatprep.subr.mxu0 0.0
        %2137 = vmatpush1.msra.mxu0 0.0
        %2138 = vmatprep.mubr.f32.mxu0 0.0
        %2139 = vmatmul.mubr.f32.gmra.mrb[0].mxu0 %v2072
        %v2140 = vpop.f32.mrb[0].mxu0
        %v2141 = vadd.f32 0.0, %v2140
        %v2142 = vpop.f32.mrb[0].mxu0
        %2143 = vdwg.mxu0
        %v2144 = vadd.f32 %v1679, %v2141
        %v2145 = vld [vmem:[%s5] sm:$0x1]
        %v2147 = vlaneseq
        %v2148 = vshrl.u32 %v2147, 7
        %v2149 = vsub.s32 0, %v2148
        %v2150 = vrot.slane %v2145, %v2149
        %v2152 = vadd.f32 %v2144, %v2150
        %2153 = vst.msk [vmem:[%s273] sm:$0xff] %vm290, %v2152
        %s2154 = sand.u32 %s164, 1
        %s2155 = scalar_lea.sflag [#allocation3], %s2154
        %s2156 = sand.u32 %s164, 1
        %s2157 = smul.addr %s2156, 8
        %s2158 = scalar_lea.vmem [#allocation2], %s2157
        %s2159 = sand.u32 %s190, 1
        %s2160 = scalar_lea.sflag [#allocation5], %s2159
        %s2161 = sand.u32 %s190, 1
        %s2162 = smul.addr %s2161, 32
        %s2163 = scalar_lea.vmem [#allocation4], %s2162
        // Predicated region
        $region45: #{tpu_custom_call.1} parent=43 // pred_check
          %p2164 = pneg %p174
        $region46: #{tpu_custom_call.1} parent=43 // pred_check_branch
          %2166 = sbr.rel (%p2164) target = $region48
        $region47: #{tpu_custom_call.1} parent=43 // pred_region
          %s2168 = ssub.s32 128, 128
          %2169 = vsyncadd %s2155, %s2168
          %s2170 = smul.addr %s25, 128
          %s2171 = scalar_lea.hbm %s6, %s2170
          %s2173 = sshll.u32 %s2158, 4
          %s2174 = int_to_ptr.vmem [resolvable:$true] %s2173
          %2176 = dma.vmem_to_hbm [thread:$0]  %s2174, 128, %s2171, %s2155
        $region48: #{tpu_custom_call.1} parent=43 // pred_fallthru
          _
        // Predicated region
        $region49: #{tpu_custom_call.1} parent=43 // pred_check
          %p2177 = pneg %p200
        $region50: #{tpu_custom_call.1} parent=43 // pred_check_branch
          %2179 = sbr.rel (%p2177) target = $region52
        $region51: #{tpu_custom_call.1} parent=43 // pred_region
          %s2181 = ssub.s32 512, 512
          %2182 = vsyncadd %s2160, %s2181
          %s2183 = smul.addr %s25, 4
          %s2184 = smul.addr %s2183, 128
          %s2185 = scalar_lea.hbm %s7, %s2184
          %s2186 = sshll.u32 %s2163, 4
          %s2187 = int_to_ptr.vmem [resolvable:$true] %s2186
          %2192 = dma.vmem_to_hbm [thread:$0]  %s2187, 512, %s2185, %s2160, 128, 128, 8
        $region52: #{tpu_custom_call.1} parent=43 // pred_fallthru
          _
      $region44: #{tpu_custom_call.1} parent=5 // pred_fallthru
        _
      %p2193 = scmp.le.s32.totalorder 2, %s20
      // Predicated region
      $region53: #{tpu_custom_call.1} parent=5 // pred_check
        %p2194 = pneg %p2193
      $region54: #{tpu_custom_call.1} parent=5 // pred_check_branch
        %2196 = sbr.rel (%p2194) target = $region56
      $region55: #{tpu_custom_call.1} parent=5 // pred_region
        %s2197 = ssub.s32 %s20, 2
        // Predicated region
        $region57: #{tpu_custom_call.1} parent=55 // pred_check
          %p2198 = pneg %p180
        $region58: #{tpu_custom_call.1} parent=55 // pred_check_branch
          %2200 = sbr.rel (%p2198) target = $region60
        $region59: #{tpu_custom_call.1} parent=55 // pred_region
          %s2201 = sand.u32 %s165, 1
          %s2202 = scalar_lea.sflag [#allocation3], %s2201
          %s2203 = sand.u32 %s165, 1
          %s2204 = smul.addr %s2203, 8
          %s2205 = scalar_lea.vmem [#allocation2], %s2204
          %2206 = dma.done %s2202, 128
        $region60: #{tpu_custom_call.1} parent=55 // pred_fallthru
          _
        // Predicated region
        $region61: #{tpu_custom_call.1} parent=55 // pred_check
          %p2207 = pneg %p206
        $region62: #{tpu_custom_call.1} parent=55 // pred_check_branch
          %2209 = sbr.rel (%p2207) target = $region64
        $region63: #{tpu_custom_call.1} parent=55 // pred_region
          %s2210 = sand.u32 %s191, 1
          %s2211 = scalar_lea.sflag [#allocation5], %s2210
          %s2212 = sand.u32 %s191, 1
          %s2213 = smul.addr %s2212, 32
          %s2214 = scalar_lea.vmem [#allocation4], %s2213
          %2215 = dma.done %s2211, 512
        $region64: #{tpu_custom_call.1} parent=55 // pred_fallthru
          _
      $region56: #{tpu_custom_call.1} parent=5 // pred_fallthru
        _
    $region6: #{tpu_custom_call.1} parent=1 // loop_footer
      %s24 = sadd.s32 1, %s20
    $region7: #{tpu_custom_call.1} parent=1 // loop_footer_branch
      %19 = sbr.rel target = $region3
    $region8: #{tpu_custom_call.1} parent=1 // loop_exit
      _
    %2216 = vsyncpa [#allocation3], 1
    %s2217 = scalar_lea.sflag [#allocation3], 1
    %2218 = vsyncpa %s2217, 1
    %2219 = vsyncpa [#allocation5], 1
    %s2220 = scalar_lea.sflag [#allocation5], 1
    %2221 = vsyncpa %s2220, 1

</llo_original>
